<compile_context>
chip_gen: v7x
topology: tpu7x:2x2x1
jax: 0.10.0
libtpu: 0.0.40
codegen_flags: <defaults>
</compile_context>

<pallas_src>
import functools
import math

import jax
import jax.numpy as jnp
from jax.experimental import pallas as pl
from jax.experimental.pallas import tpu as pltpu


# ----------------------------------------------------------------------------
# Pallas kernels (fused, VMEM-resident)
# ----------------------------------------------------------------------------

def _attn_block_kernel(x_ref, lnw_ref, wqkv_ref, wo_ref, bias_ref, o_ref,
                       *, n_heads, eps):
    """x + SelfAttention(T5RMSNorm(x)); one batch element per grid step."""
    x = x_ref[0]                                        # (S, D) f32
    s_len, d = x.shape
    dh = d // n_heads

    # T5 layer norm: RMS only (no mean subtraction, no bias), f32 math.
    var = jnp.mean(x * x, axis=-1, keepdims=True)
    h = x * jax.lax.rsqrt(var + eps) * lnw_ref[...]

    # Fused QKV projection: (S, D) @ (D, 3D) -> lane-dense (S, 384) output.
    qkv = jnp.dot(h.astype(jnp.bfloat16), wqkv_ref[...],
                  preferred_element_type=jnp.float32)
    q = qkv[:, 0 * d:1 * d]
    k = qkv[:, 1 * d:2 * d]
    v = qkv[:, 2 * d:3 * d]

    # All heads inside one kernel invocation.  NOTE: T5 uses NO 1/sqrt(dh) scaling.
    outs = []
    for head in range(n_heads):
        qs = q[:, head * dh:(head + 1) * dh]
        ks = k[:, head * dh:(head + 1) * dh]
        vs = v[:, head * dh:(head + 1) * dh]
        s = jax.lax.dot_general(qs, ks, (((1,), (1,)), ((), ())),
                                preferred_element_type=jnp.float32)
        s = s + bias_ref[0, head]                       # rel-pos bias + padding mask
        s = s - jnp.max(s, axis=-1, keepdims=True)
        p = jnp.exp(s)
        p = p * pl.reciprocal(jnp.sum(p, axis=-1, keepdims=True), approx=True)
        outs.append(jnp.dot(p.astype(jnp.bfloat16), vs.astype(jnp.bfloat16),
                            preferred_element_type=jnp.float32))
    attn = jnp.concatenate(outs, axis=-1)               # (S, D)

    y = jnp.dot(attn.astype(jnp.bfloat16), wo_ref[...],
                preferred_element_type=jnp.float32)
    o_ref[...] = (x + y)[None].astype(o_ref.dtype)      # residual fused (dropout=id)


def _ff_block_kernel(x_ref, lnw_ref, wi_ref, wo_ref, o_ref, *, eps):
    """x + DenseReluDense(T5RMSNorm(x)); one batch element per grid step."""
    x = x_ref[0]                                        # (S, D) f32
    var = jnp.mean(x * x, axis=-1, keepdims=True)
    h = x * jax.lax.rsqrt(var + eps) * lnw_ref[...]
    h = jnp.dot(h.astype(jnp.bfloat16), wi_ref[...],
                preferred_element_type=jnp.float32)
    h = jnp.maximum(h, 0.0)                             # ReLU (t5-base FF activation)
    y = jnp.dot(h.astype(jnp.bfloat16), wo_ref[...],
                preferred_element_type=jnp.float32)
    o_ref[...] = (x + y)[None].astype(o_ref.dtype)


def _pool_proj_kernel(x_ref, lnw_ref, wp_ref, o_ref, *, eps):
    """Final T5RMSNorm -> mean over sequence (matches hid.mean(dim=1)) -> proj."""
    x = x_ref[...]                                      # (B, S, D) f32
    var = jnp.mean(x * x, axis=-1, keepdims=True)
    h = x * jax.lax.rsqrt(var + eps) * lnw_ref[...]
    pooled = jnp.mean(h, axis=1)                        # (B, D) plain mean (incl. pads)
    o_ref[...] = jnp.dot(pooled.astype(jnp.bfloat16), wp_ref[...],
                         preferred_element_type=jnp.float32).astype(o_ref.dtype)


# ----------------------------------------------------------------------------
# pallas_call wrappers (trace-time construction; whole forward is one jit)
# ----------------------------------------------------------------------------

def attn_block(x, lnw, wqkv, wo, bias, *, n_heads, eps=1e-6):
    b, s, d = x.shape
    h = n_heads
    return pl.pallas_call(
        functools.partial(_attn_block_kernel, n_heads=n_heads, eps=eps),
        out_shape=jax.ShapeDtypeStruct((b, s, d), jnp.float32),
        grid=(b,),
        in_specs=[
            pl.BlockSpec((1, s, d), lambda i: (i, 0, 0)),
            pl.BlockSpec((1, d), lambda i: (0, 0)),
            pl.BlockSpec((d, 3 * d), lambda i: (0, 0)),
            pl.BlockSpec((d, d), lambda i: (0, 0)),
            pl.BlockSpec((1, h, s, s), lambda i: (i, 0, 0, 0)),
        ],
        out_specs=pl.BlockSpec((1, s, d), lambda i: (i, 0, 0)),
        compiler_params=pltpu.CompilerParams(dimension_semantics=("parallel",)),
    )(x, lnw.reshape(1, d), wqkv, wo, bias)


def ff_block(x, lnw, wi, wo, *, eps=1e-6):
    b, s, d = x.shape
    f = wi.shape[1]
    return pl.pallas_call(
        functools.partial(_ff_block_kernel, eps=eps),
        out_shape=jax.ShapeDtypeStruct((b, s, d), jnp.float32),
        grid=(b,),
        in_specs=[
            pl.BlockSpec((1, s, d), lambda i: (i, 0, 0)),
            pl.BlockSpec((1, d), lambda i: (0, 0)),
            pl.BlockSpec((d, f), lambda i: (0, 0)),
            pl.BlockSpec((f, d), lambda i: (0, 0)),
        ],
        out_specs=pl.BlockSpec((1, s, d), lambda i: (i, 0, 0)),
        compiler_params=pltpu.CompilerParams(dimension_semantics=("parallel",)),
    )(x, lnw.reshape(1, d), wi, wo)


def pool_proj(x, lnw, wp, *, eps=1e-6):
    b, s, d = x.shape
    p = wp.shape[1]
    return pl.pallas_call(
        functools.partial(_pool_proj_kernel, eps=eps),
        out_shape=jax.ShapeDtypeStruct((b, p), jnp.float32),
        grid=(1,),
        in_specs=[
            pl.BlockSpec((b, s, d), lambda i: (0, 0, 0)),
            pl.BlockSpec((1, d), lambda i: (0, 0)),
            pl.BlockSpec((d, p), lambda i: (0, 0)),
        ],
        out_specs=pl.BlockSpec((b, p), lambda i: (0, 0)),
        compiler_params=pltpu.CompilerParams(dimension_semantics=("arbitrary",)),
    )(x, lnw.reshape(1, d), wp)


# ----------------------------------------------------------------------------
# T5 relative-position bias (plain-JAX glue; depends only on static seq length)
# ----------------------------------------------------------------------------

def _relative_position_bucket(relative_position, num_buckets=32, max_distance=128):
    # bidirectional (encoder) bucketing, mirrors HF T5Attention._relative_position_bucket
    num_buckets = num_buckets // 2
    relative_buckets = (relative_position > 0).astype(jnp.int32) * num_buckets
    relative_position = jnp.abs(relative_position)
    max_exact = num_buckets // 2
    is_small = relative_position < max_exact
    rel_if_large = max_exact + (
        jnp.log(jnp.maximum(relative_position, 1).astype(jnp.float32) / max_exact)
        / math.log(max_distance / max_exact) * (num_buckets - max_exact)
    ).astype(jnp.int32)
    rel_if_large = jnp.minimum(rel_if_large, num_buckets - 1)
    return relative_buckets + jnp.where(is_small, relative_position, rel_if_large)


def compute_position_bias(rel_bias_table, seq_len, num_buckets=32, max_distance=128):
    ctx = jnp.arange(seq_len, dtype=jnp.int32)[:, None]
    mem = jnp.arange(seq_len, dtype=jnp.int32)[None, :]
    buckets = _relative_position_bucket(mem - ctx, num_buckets, max_distance)
    values = rel_bias_table[buckets]                    # (S, S, H)
    return jnp.transpose(values, (2, 0, 1))             # (H, S, S)


# ----------------------------------------------------------------------------
# Forward (one jit over the whole PromptEncoder forward)
# ----------------------------------------------------------------------------

@functools.partial(jax.jit, static_argnames=("n_heads",))
def prompt_encoder_forward(params, input_ids, attention_mask, n_heads):
    b, s = input_ids.shape

    # Token embedding lookup (XLA gather glue inside the single jit).
    x = params["embedding"][input_ids]                  # (B, S, D) f32

    # Shared relative-position bias (layer 0's table, reused by every layer, as in T5)
    # plus the additive padding mask over keys.
    pos_bias = compute_position_bias(params["rel_bias"], s)          # (H, S, S)
    mask_bias = (1.0 - attention_mask.astype(jnp.float32)) * -1e9    # (B, S)
    bias = pos_bias[None] + mask_bias[:, None, None, :]              # (B, H, S, S)

    for layer in params["layers"]:
        x = attn_block(x, layer["ln1"], layer["wqkv"], layer["wo"], bias,
                       n_heads=n_heads)
        x = ff_block(x, layer["ln2"], layer["wi"], layer["wo_ff"])

    # final_layer_norm + dropout(identity) -> mean pool over seq -> proj (no bias)
    return pool_proj(x, params["ln_f"], params["proj"])


# ----------------------------------------------------------------------------
# Parameter construction (deterministic, synthetic)
# ----------------------------------------------------------------------------

def build_params(seed, vocab, d_model, n_heads, d_ff, n_layers, proj_dim,
                 num_buckets=32):
    key = [jax.random.PRNGKey(seed)]

    def nxt():
        key[0], k = jax.random.split(key[0])
        return k

    def w(shape, fan_in, dtype=jnp.bfloat16):
        return (jax.random.normal(nxt(), shape, jnp.float32)
                * (1.0 / math.sqrt(fan_in))).astype(dtype)

    params = {
        "embedding": jax.random.normal(nxt(), (vocab, d_model), jnp.float32) * 0.02,
        "rel_bias": jax.random.normal(nxt(), (num_buckets, n_heads), jnp.float32) * 0.02,
        "ln_f": jnp.ones((d_model,), jnp.float32),
        "proj": w((d_model, proj_dim), d_model),        # nn.Linear(d_model, proj, bias=False)
        "layers": [],
    }
    for _ in range(n_layers):
        params["layers"].append({
            "ln1": jnp.ones((d_model,), jnp.float32),
            "wqkv": w((d_model, 3 * d_model), d_model),  # fused Q|K|V projection
            "wo": w((d_model, d_model), d_model),
            "ln2": jnp.ones((d_model,), jnp.float32),
            "wi": w((d_model, d_ff), d_model),
            "wo_ff": w((d_ff, d_model), d_ff),
        })
    return params


# ----------------------------------------------------------------------------
# Demo
# ----------------------------------------------------------------------------

if __name__ == "__main__":
    # Scaled-down t5-like config (t5-base is d_model=768, 12 layers, 12 heads).
    B, S = 2, 16
    VOCAB, D, HEADS, D_FF, LAYERS, PROJ = 512, 128, 4, 256, 2, 256

    params = build_params(0, VOCAB, D, HEADS, D_FF, LAYERS, PROJ)

    key = jax.random.PRNGKey(0)
    k_ids, _ = jax.random.split(key)
    # Pre-tokenized prompts (tokenizer itself is host-side, not a kernel).
    input_ids = jax.random.randint(k_ids, (B, S), 0, VOCAB, dtype=jnp.int32)
    # Second prompt shorter -> padded (mimics tokenizer(padding=True)).
    attention_mask = jnp.array([[1] * S, [1] * (S - 3) + [0] * 3], dtype=jnp.int32)

    out = prompt_encoder_forward(params, input_ids, attention_mask, n_heads=HEADS)
    out = jax.block_until_ready(out)

    assert out.shape == (B, PROJ), out.shape
    assert out.dtype == jnp.float32
    assert bool(jnp.all(jnp.isfinite(out)))
    print("KERNEL_OK")
</pallas_src>

<mosaic_0001>
module attributes {stable_mosaic.version = 11 : i64} {
  func.func @_ff_block_kernel(%arg0: i32, %arg1: memref<1x16x128xf32, #tpu.memory_space<vmem>>, %arg2: memref<1x128xf32, #tpu.memory_space<vmem>>, %arg3: memref<128x256xbf16, #tpu.memory_space<vmem>>, %arg4: memref<256x128xbf16, #tpu.memory_space<vmem>>, %arg5: memref<1x16x128xf32, #tpu.memory_space<vmem>>) attributes {dimension_semantics = [#tpu.dimension_semantics<parallel>], iteration_bounds = array<i64: 2>, scalar_prefetch = 0 : i64, scratch_operands = 0 : i64, tpu.core_type = #tpu.core_type<tc>, window_params = [{transform_indices = @transform_0, window_bounds = array<i64: 1, 16, 128>}, {pipeline_mode = #tpu.pipeline_mode<synchronous>, transform_indices = @transform_1, window_bounds = array<i64: 1, 128>}, {pipeline_mode = #tpu.pipeline_mode<synchronous>, transform_indices = @transform_2, window_bounds = array<i64: 128, 256>}, {pipeline_mode = #tpu.pipeline_mode<synchronous>, transform_indices = @transform_3, window_bounds = array<i64: 256, 128>}, {transform_indices = @transform_4, window_bounds = array<i64: 1, 16, 128>}]} {
    %c0 = arith.constant 0 : index
    %c0_0 = arith.constant 0 : index
    %c0_1 = arith.constant 0 : index
    %0 = vector.load %arg1[%c0, %c0_0, %c0_1] : memref<1x16x128xf32, #tpu.memory_space<vmem>>, vector<1x16x128xf32>
    %1 = vector.shape_cast %0 : vector<1x16x128xf32> to vector<16x128xf32>
    %2 = arith.mulf %1, %1 : vector<16x128xf32>
    %cst = arith.constant dense<0.000000e+00> : vector<16xf32>
    %3 = vector.multi_reduction <add>, %2, %cst [1] : vector<16x128xf32> to vector<16xf32>
    %4 = vector.shape_cast %3 : vector<16xf32> to vector<16x1xf32>
    %cst_2 = arith.constant 1.280000e+02 : f32
    %5 = vector.broadcast %cst_2 : f32 to vector<16x1xf32>
    %6 = arith.divf %4, %5 : vector<16x1xf32>
    %cst_3 = arith.constant 9.99999997E-7 : f32
    %7 = vector.broadcast %cst_3 : f32 to vector<16x1xf32>
    %8 = arith.addf %6, %7 : vector<16x1xf32>
    %9 = math.rsqrt %8 : vector<16x1xf32>
    %10 = vector.broadcast %9 : vector<16x1xf32> to vector<16x128xf32>
    %11 = arith.mulf %1, %10 : vector<16x128xf32>
    %c0_4 = arith.constant 0 : index
    %c0_5 = arith.constant 0 : index
    %12 = vector.load %arg2[%c0_4, %c0_5] : memref<1x128xf32, #tpu.memory_space<vmem>>, vector<1x128xf32>
    %13 = vector.broadcast %12 : vector<1x128xf32> to vector<16x128xf32>
    %14 = arith.mulf %11, %13 : vector<16x128xf32>
    %15 = arith.truncf %14 : vector<16x128xf32> to vector<16x128xbf16>
    %c0_6 = arith.constant 0 : index
    %c0_7 = arith.constant 0 : index
    %16 = vector.load %arg3[%c0_6, %c0_7] : memref<128x256xbf16, #tpu.memory_space<vmem>>, vector<128x256xbf16>
    %cst_8 = arith.constant dense<0.000000e+00> : vector<16x256xf32>
    %17 = tpu.matmul %15, %16, %cst_8 {dimension_numbers = #tpu.dot_dimension_numbers<[1], [0], [0], [1], [0, 0, 1, 1], [], []>} : vector<16x128xbf16>, vector<128x256xbf16>, vector<16x256xf32> -> vector<16x256xf32>
    %cst_9 = arith.constant 0.000000e+00 : f32
    %18 = vector.broadcast %cst_9 : f32 to vector<16x256xf32>
    %19 = arith.maximumf %17, %18 : vector<16x256xf32>
    %20 = arith.truncf %19 : vector<16x256xf32> to vector<16x256xbf16>
    %c0_10 = arith.constant 0 : index
    %c0_11 = arith.constant 0 : index
    %21 = vector.load %arg4[%c0_10, %c0_11] : memref<256x128xbf16, #tpu.memory_space<vmem>>, vector<256x128xbf16>
    %cst_12 = arith.constant dense<0.000000e+00> : vector<16x128xf32>
    %22 = tpu.matmul %20, %21, %cst_12 {dimension_numbers = #tpu.dot_dimension_numbers<[1], [0], [0], [1], [0, 0, 1, 1], [], []>} : vector<16x256xbf16>, vector<256x128xbf16>, vector<16x128xf32> -> vector<16x128xf32>
    %23 = arith.addf %1, %22 : vector<16x128xf32>
    %24 = vector.shape_cast %23 : vector<16x128xf32> to vector<1x16x128xf32>
    %c0_13 = arith.constant 0 : index
    %c0_14 = arith.constant 0 : index
    %c0_15 = arith.constant 0 : index
    %25 = vector.load %arg5[%c0_13, %c0_14, %c0_15] : memref<1x16x128xf32, #tpu.memory_space<vmem>>, vector<1x16x128xf32>
    tpu.vector_store %arg5[%c0_13, %c0_14, %c0_15], %24 {strides = array<i32>} : memref<1x16x128xf32, #tpu.memory_space<vmem>>, vector<1x16x128xf32>,
    return
  }
  func.func @transform_0(%arg0: i32) -> (i32, i32, i32) {
    %c0_i32 = arith.constant 0 : i32
    %c0_i32_0 = arith.constant 0 : i32
    %c0_i32_1 = arith.constant 0 : i32
    return %arg0, %c0_i32, %c0_i32_0 : i32, i32, i32
  }
  func.func @transform_1(%arg0: i32) -> (i32, i32) {
    %c0_i32 = arith.constant 0 : i32
    %c0_i32_0 = arith.constant 0 : i32
    %c0_i32_1 = arith.constant 0 : i32
    return %c0_i32, %c0_i32_0 : i32, i32
  }
  func.func @transform_2(%arg0: i32) -> (i32, i32) {
    %c0_i32 = arith.constant 0 : i32
    %c0_i32_0 = arith.constant 0 : i32
    %c0_i32_1 = arith.constant 0 : i32
    return %c0_i32, %c0_i32_0 : i32, i32
  }
  func.func @transform_3(%arg0: i32) -> (i32, i32) {
    %c0_i32 = arith.constant 0 : i32
    %c0_i32_0 = arith.constant 0 : i32
    %c0_i32_1 = arith.constant 0 : i32
    return %c0_i32, %c0_i32_0 : i32, i32
  }
  func.func @transform_4(%arg0: i32) -> (i32, i32, i32) {
    %c0_i32 = arith.constant 0 : i32
    %c0_i32_0 = arith.constant 0 : i32
    %c0_i32_1 = arith.constant 0 : i32
    return %arg0, %c0_i32, %c0_i32_0 : i32, i32, i32
  }
}

module attributes {stable_mosaic.version = 11 : i64} {
  func.func @_attn_block_kernel(%arg0: i32, %arg1: memref<1x16x128xf32, #tpu.memory_space<vmem>>, %arg2: memref<1x128xf32, #tpu.memory_space<vmem>>, %arg3: memref<128x384xbf16, #tpu.memory_space<vmem>>, %arg4: memref<128x128xbf16, #tpu.memory_space<vmem>>, %arg5: memref<1x4x16x16xf32, #tpu.memory_space<vmem>>, %arg6: memref<1x16x128xf32, #tpu.memory_space<vmem>>) attributes {dimension_semantics = [#tpu.dimension_semantics<parallel>], iteration_bounds = array<i64: 2>, scalar_prefetch = 0 : i64, scratch_operands = 0 : i64, tpu.core_type = #tpu.core_type<tc>, window_params = [{transform_indices = @transform_0, window_bounds = array<i64: 1, 16, 128>}, {pipeline_mode = #tpu.pipeline_mode<synchronous>, transform_indices = @transform_1, window_bounds = array<i64: 1, 128>}, {pipeline_mode = #tpu.pipeline_mode<synchronous>, transform_indices = @transform_2, window_bounds = array<i64: 128, 384>}, {pipeline_mode = #tpu.pipeline_mode<synchronous>, transform_indices = @transform_3, window_bounds = array<i64: 128, 128>}, {transform_indices = @transform_4, window_bounds = array<i64: 1, 4, 16, 16>}, {transform_indices = @transform_5, window_bounds = array<i64: 1, 16, 128>}]} {
    %c0 = arith.constant 0 : index
    %c0_0 = arith.constant 0 : index
    %c0_1 = arith.constant 0 : index
    %0 = vector.load %arg1[%c0, %c0_0, %c0_1] : memref<1x16x128xf32, #tpu.memory_space<vmem>>, vector<1x16x128xf32>
    %1 = vector.shape_cast %0 : vector<1x16x128xf32> to vector<16x128xf32>
    %2 = arith.mulf %1, %1 : vector<16x128xf32>
    %cst = arith.constant dense<0.000000e+00> : vector<16xf32>
    %3 = vector.multi_reduction <add>, %2, %cst [1] : vector<16x128xf32> to vector<16xf32>
    %4 = vector.shape_cast %3 : vector<16xf32> to vector<16x1xf32>
    %cst_2 = arith.constant 1.280000e+02 : f32
    %5 = vector.broadcast %cst_2 : f32 to vector<16x1xf32>
    %6 = arith.divf %4, %5 : vector<16x1xf32>
    %cst_3 = arith.constant 9.99999997E-7 : f32
    %7 = vector.broadcast %cst_3 : f32 to vector<16x1xf32>
    %8 = arith.addf %6, %7 : vector<16x1xf32>
    %9 = math.rsqrt %8 : vector<16x1xf32>
    %10 = vector.broadcast %9 : vector<16x1xf32> to vector<16x128xf32>
    %11 = arith.mulf %1, %10 : vector<16x128xf32>
    %c0_4 = arith.constant 0 : index
    %c0_5 = arith.constant 0 : index
    %12 = vector.load %arg2[%c0_4, %c0_5] : memref<1x128xf32, #tpu.memory_space<vmem>>, vector<1x128xf32>
    %13 = vector.broadcast %12 : vector<1x128xf32> to vector<16x128xf32>
    %14 = arith.mulf %11, %13 : vector<16x128xf32>
    %15 = arith.truncf %14 : vector<16x128xf32> to vector<16x128xbf16>
    %c0_6 = arith.constant 0 : index
    %c0_7 = arith.constant 0 : index
    %16 = vector.load %arg3[%c0_6, %c0_7] : memref<128x384xbf16, #tpu.memory_space<vmem>>, vector<128x384xbf16>
    %cst_8 = arith.constant dense<0.000000e+00> : vector<16x384xf32>
    %17 = tpu.matmul %15, %16, %cst_8 {dimension_numbers = #tpu.dot_dimension_numbers<[1], [0], [0], [1], [0, 0, 1, 1], [], []>} : vector<16x128xbf16>, vector<128x384xbf16>, vector<16x384xf32> -> vector<16x384xf32>
    %18 = vector.extract_strided_slice %17 {offsets = [0, 0], sizes = [16, 128], strides = [1, 1]} : vector<16x384xf32> to vector<16x128xf32>
    %19 = vector.extract_strided_slice %17 {offsets = [0, 128], sizes = [16, 128], strides = [1, 1]} : vector<16x384xf32> to vector<16x128xf32>
    %20 = vector.extract_strided_slice %17 {offsets = [0, 256], sizes = [16, 128], strides = [1, 1]} : vector<16x384xf32> to vector<16x128xf32>
    %21 = vector.extract_strided_slice %18 {offsets = [0, 0], sizes = [16, 32], strides = [1, 1]} : vector<16x128xf32> to vector<16x32xf32>
    %22 = vector.extract_strided_slice %19 {offsets = [0, 0], sizes = [16, 32], strides = [1, 1]} : vector<16x128xf32> to vector<16x32xf32>
    %23 = vector.extract_strided_slice %20 {offsets = [0, 0], sizes = [16, 32], strides = [1, 1]} : vector<16x128xf32> to vector<16x32xf32>
    %cst_9 = arith.constant dense<0.000000e+00> : vector<16x16xf32>
    %24 = tpu.matmul %21, %22, %cst_9 {dimension_numbers = #tpu.dot_dimension_numbers<[1], [1], [0], [0], [0, 0, 1, 0], [], []>} : vector<16x32xf32>, vector<16x32xf32>, vector<16x16xf32> -> vector<16x16xf32>
    %c0_10 = arith.constant 0 : index
    %c0_11 = arith.constant 0 : index
    %c0_12 = arith.constant 0 : index
    %c0_13 = arith.constant 0 : index
    %25 = vector.load %arg5[%c0_10, %c0_11, %c0_12, %c0_13] : memref<1x4x16x16xf32, #tpu.memory_space<vmem>>, vector<1x1x16x16xf32>
    %26 = vector.shape_cast %25 : vector<1x1x16x16xf32> to vector<16x16xf32>
    %27 = arith.addf %24, %26 : vector<16x16xf32>
    %cst_14 = arith.constant dense<0xFF800000> : vector<16xf32>
    %28 = vector.multi_reduction <maximumf>, %27, %cst_14 [1] : vector<16x16xf32> to vector<16xf32>
    %29 = vector.shape_cast %28 : vector<16xf32> to vector<16x1xf32>
    %30 = vector.broadcast %29 : vector<16x1xf32> to vector<16x16xf32>
    %31 = arith.subf %27, %30 : vector<16x16xf32>
    %32 = math.exp %31 : vector<16x16xf32>
    %cst_15 = arith.constant dense<0.000000e+00> : vector<16xf32>
    %33 = vector.multi_reduction <add>, %32, %cst_15 [1] : vector<16x16xf32> to vector<16xf32>
    %34 = vector.shape_cast %33 : vector<16xf32> to vector<16x1xf32>
    %35 = tpu.reciprocal %34 {approx = true} : vector<16x1xf32> -> vector<16x1xf32>
    %36 = vector.broadcast %35 : vector<16x1xf32> to vector<16x16xf32>
    %37 = arith.mulf %32, %36 : vector<16x16xf32>
    %38 = arith.truncf %37 : vector<16x16xf32> to vector<16x16xbf16>
    %39 = arith.truncf %23 : vector<16x32xf32> to vector<16x32xbf16>
    %cst_16 = arith.constant dense<0.000000e+00> : vector<16x32xf32>
    %40 = tpu.matmul %38, %39, %cst_16 {dimension_numbers = #tpu.dot_dimension_numbers<[1], [0], [0], [1], [0, 0, 1, 1], [], []>} : vector<16x16xbf16>, vector<16x32xbf16>, vector<16x32xf32> -> vector<16x32xf32>
    %41 = vector.extract_strided_slice %18 {offsets = [0, 32], sizes = [16, 32], strides = [1, 1]} : vector<16x128xf32> to vector<16x32xf32>
    %42 = vector.extract_strided_slice %19 {offsets = [0, 32], sizes = [16, 32], strides = [1, 1]} : vector<16x128xf32> to vector<16x32xf32>
    %43 = vector.extract_strided_slice %20 {offsets = [0, 32], sizes = [16, 32], strides = [1, 1]} : vector<16x128xf32> to vector<16x32xf32>
    %cst_17 = arith.constant dense<0.000000e+00> : vector<16x16xf32>
    %44 = tpu.matmul %41, %42, %cst_17 {dimension_numbers = #tpu.dot_dimension_numbers<[1], [1], [0], [0], [0, 0, 1, 0], [], []>} : vector<16x32xf32>, vector<16x32xf32>, vector<16x16xf32> -> vector<16x16xf32>
    %c0_18 = arith.constant 0 : index
    %c1 = arith.constant 1 : index
    %c0_19 = arith.constant 0 : index
    %c0_20 = arith.constant 0 : index
    %45 = vector.load %arg5[%c0_18, %c1, %c0_19, %c0_20] : memref<1x4x16x16xf32, #tpu.memory_space<vmem>>, vector<1x1x16x16xf32>
    %46 = vector.shape_cast %45 : vector<1x1x16x16xf32> to vector<16x16xf32>
    %47 = arith.addf %44, %46 : vector<16x16xf32>
    %cst_21 = arith.constant dense<0xFF800000> : vector<16xf32>
    %48 = vector.multi_reduction <maximumf>, %47, %cst_21 [1] : vector<16x16xf32> to vector<16xf32>
    %49 = vector.shape_cast %48 : vector<16xf32> to vector<16x1xf32>
    %50 = vector.broadcast %49 : vector<16x1xf32> to vector<16x16xf32>
    %51 = arith.subf %47, %50 : vector<16x16xf32>
    %52 = math.exp %51 : vector<16x16xf32>
    %cst_22 = arith.constant dense<0.000000e+00> : vector<16xf32>
    %53 = vector.multi_reduction <add>, %52, %cst_22 [1] : vector<16x16xf32> to vector<16xf32>
    %54 = vector.shape_cast %53 : vector<16xf32> to vector<16x1xf32>
    %55 = tpu.reciprocal %54 {approx = true} : vector<16x1xf32> -> vector<16x1xf32>
    %56 = vector.broadcast %55 : vector<16x1xf32> to vector<16x16xf32>
    %57 = arith.mulf %52, %56 : vector<16x16xf32>
    %58 = arith.truncf %57 : vector<16x16xf32> to vector<16x16xbf16>
    %59 = arith.truncf %43 : vector<16x32xf32> to vector<16x32xbf16>
    %cst_23 = arith.constant dense<0.000000e+00> : vector<16x32xf32>
    %60 = tpu.matmul %58, %59, %cst_23 {dimension_numbers = #tpu.dot_dimension_numbers<[1], [0], [0], [1], [0, 0, 1, 1], [], []>} : vector<16x16xbf16>, vector<16x32xbf16>, vector<16x32xf32> -> vector<16x32xf32>
    %61 = vector.extract_strided_slice %18 {offsets = [0, 64], sizes = [16, 32], strides = [1, 1]} : vector<16x128xf32> to vector<16x32xf32>
    %62 = vector.extract_strided_slice %19 {offsets = [0, 64], sizes = [16, 32], strides = [1, 1]} : vector<16x128xf32> to vector<16x32xf32>
    %63 = vector.extract_strided_slice %20 {offsets = [0, 64], sizes = [16, 32], strides = [1, 1]} : vector<16x128xf32> to vector<16x32xf32>
    %cst_24 = arith.constant dense<0.000000e+00> : vector<16x16xf32>
    %64 = tpu.matmul %61, %62, %cst_24 {dimension_numbers = #tpu.dot_dimension_numbers<[1], [1], [0], [0], [0, 0, 1, 0], [], []>} : vector<16x32xf32>, vector<16x32xf32>, vector<16x16xf32> -> vector<16x16xf32>
    %c0_25 = arith.constant 0 : index
    %c2 = arith.constant 2 : index
    %c0_26 = arith.constant 0 : index
    %c0_27 = arith.constant 0 : index
    %65 = vector.load %arg5[%c0_25, %c2, %c0_26, %c0_27] : memref<1x4x16x16xf32, #tpu.memory_space<vmem>>, vector<1x1x16x16xf32>
    %66 = vector.shape_cast %65 : vector<1x1x16x16xf32> to vector<16x16xf32>
    %67 = arith.addf %64, %66 : vector<16x16xf32>
    %cst_28 = arith.constant dense<0xFF800000> : vector<16xf32>
    %68 = vector.multi_reduction <maximumf>, %67, %cst_28 [1] : vector<16x16xf32> to vector<16xf32>
    %69 = vector.shape_cast %68 : vector<16xf32> to vector<16x1xf32>
    %70 = vector.broadcast %69 : vector<16x1xf32> to vector<16x16xf32>
    %71 = arith.subf %67, %70 : vector<16x16xf32>
    %72 = math.exp %71 : vector<16x16xf32>
    %cst_29 = arith.constant dense<0.000000e+00> : vector<16xf32>
    %73 = vector.multi_reduction <add>, %72, %cst_29 [1] : vector<16x16xf32> to vector<16xf32>
    %74 = vector.shape_cast %73 : vector<16xf32> to vector<16x1xf32>
    %75 = tpu.reciprocal %74 {approx = true} : vector<16x1xf32> -> vector<16x1xf32>
    %76 = vector.broadcast %75 : vector<16x1xf32> to vector<16x16xf32>
    %77 = arith.mulf %72, %76 : vector<16x16xf32>
    %78 = arith.truncf %77 : vector<16x16xf32> to vector<16x16xbf16>
    %79 = arith.truncf %63 : vector<16x32xf32> to vector<16x32xbf16>
    %cst_30 = arith.constant dense<0.000000e+00> : vector<16x32xf32>
    %80 = tpu.matmul %78, %79, %cst_30 {dimension_numbers = #tpu.dot_dimension_numbers<[1], [0], [0], [1], [0, 0, 1, 1], [], []>} : vector<16x16xbf16>, vector<16x32xbf16>, vector<16x32xf32> -> vector<16x32xf32>
    %81 = vector.extract_strided_slice %18 {offsets = [0, 96], sizes = [16, 32], strides = [1, 1]} : vector<16x128xf32> to vector<16x32xf32>
    %82 = vector.extract_strided_slice %19 {offsets = [0, 96], sizes = [16, 32], strides = [1, 1]} : vector<16x128xf32> to vector<16x32xf32>
    %83 = vector.extract_strided_slice %20 {offsets = [0, 96], sizes = [16, 32], strides = [1, 1]} : vector<16x128xf32> to vector<16x32xf32>
    %cst_31 = arith.constant dense<0.000000e+00> : vector<16x16xf32>
    %84 = tpu.matmul %81, %82, %cst_31 {dimension_numbers = #tpu.dot_dimension_numbers<[1], [1], [0], [0], [0, 0, 1, 0], [], []>} : vector<16x32xf32>, vector<16x32xf32>, vector<16x16xf32> -> vector<16x16xf32>
    %c0_32 = arith.constant 0 : index
    %c3 = arith.constant 3 : index
    %c0_33 = arith.constant 0 : index
    %c0_34 = arith.constant 0 : index
    %85 = vector.load %arg5[%c0_32, %c3, %c0_33, %c0_34] : memref<1x4x16x16xf32, #tpu.memory_space<vmem>>, vector<1x1x16x16xf32>
    %86 = vector.shape_cast %85 : vector<1x1x16x16xf32> to vector<16x16xf32>
    %87 = arith.addf %84, %86 : vector<16x16xf32>
    %cst_35 = arith.constant dense<0xFF800000> : vector<16xf32>
    %88 = vector.multi_reduction <maximumf>, %87, %cst_35 [1] : vector<16x16xf32> to vector<16xf32>
    %89 = vector.shape_cast %88 : vector<16xf32> to vector<16x1xf32>
    %90 = vector.broadcast %89 : vector<16x1xf32> to vector<16x16xf32>
    %91 = arith.subf %87, %90 : vector<16x16xf32>
    %92 = math.exp %91 : vector<16x16xf32>
    %cst_36 = arith.constant dense<0.000000e+00> : vector<16xf32>
    %93 = vector.multi_reduction <add>, %92, %cst_36 [1] : vector<16x16xf32> to vector<16xf32>
    %94 = vector.shape_cast %93 : vector<16xf32> to vector<16x1xf32>
    %95 = tpu.reciprocal %94 {approx = true} : vector<16x1xf32> -> vector<16x1xf32>
    %96 = vector.broadcast %95 : vector<16x1xf32> to vector<16x16xf32>
    %97 = arith.mulf %92, %96 : vector<16x16xf32>
    %98 = arith.truncf %97 : vector<16x16xf32> to vector<16x16xbf16>
    %99 = arith.truncf %83 : vector<16x32xf32> to vector<16x32xbf16>
    %cst_37 = arith.constant dense<0.000000e+00> : vector<16x32xf32>
    %100 = tpu.matmul %98, %99, %cst_37 {dimension_numbers = #tpu.dot_dimension_numbers<[1], [0], [0], [1], [0, 0, 1, 1], [], []>} : vector<16x16xbf16>, vector<16x32xbf16>, vector<16x32xf32> -> vector<16x32xf32>
    %101 = tpu.concatenate %40, %60, %80, %100 in 1 : vector<16x32xf32>, vector<16x32xf32>, vector<16x32xf32>, vector<16x32xf32> -> vector<16x128xf32>
    %102 = arith.truncf %101 : vector<16x128xf32> to vector<16x128xbf16>
    %c0_38 = arith.constant 0 : index
    %c0_39 = arith.constant 0 : index
    %103 = vector.load %arg4[%c0_38, %c0_39] : memref<128x128xbf16, #tpu.memory_space<vmem>>, vector<128x128xbf16>
    %cst_40 = arith.constant dense<0.000000e+00> : vector<16x128xf32>
    %104 = tpu.matmul %102, %103, %cst_40 {dimension_numbers = #tpu.dot_dimension_numbers<[1], [0], [0], [1], [0, 0, 1, 1], [], []>} : vector<16x128xbf16>, vector<128x128xbf16>, vector<16x128xf32> -> vector<16x128xf32>
    %105 = arith.addf %1, %104 : vector<16x128xf32>
    %106 = vector.shape_cast %105 : vector<16x128xf32> to vector<1x16x128xf32>
    %c0_41 = arith.constant 0 : index
    %c0_42 = arith.constant 0 : index
    %c0_43 = arith.constant 0 : index
    %107 = vector.load %arg6[%c0_41, %c0_42, %c0_43] : memref<1x16x128xf32, #tpu.memory_space<vmem>>, vector<1x16x128xf32>
    tpu.vector_store %arg6[%c0_41, %c0_42, %c0_43], %106 {strides = array<i32>} : memref<1x16x128xf32, #tpu.memory_space<vmem>>, vector<1x16x128xf32>,
    return
  }
  func.func @transform_0(%arg0: i32) -> (i32, i32, i32) {
    %c0_i32 = arith.constant 0 : i32
    %c0_i32_0 = arith.constant 0 : i32
    %c0_i32_1 = arith.constant 0 : i32
    return %arg0, %c0_i32, %c0_i32_0 : i32, i32, i32
  }
  func.func @transform_1(%arg0: i32) -> (i32, i32) {
    %c0_i32 = arith.constant 0 : i32
    %c0_i32_0 = arith.constant 0 : i32
    %c0_i32_1 = arith.constant 0 : i32
    return %c0_i32, %c0_i32_0 : i32, i32
  }
  func.func @transform_2(%arg0: i32) -> (i32, i32) {
    %c0_i32 = arith.constant 0 : i32
    %c0_i32_0 = arith.constant 0 : i32
    %c0_i32_1 = arith.constant 0 : i32
    return %c0_i32, %c0_i32_0 : i32, i32
  }
  func.func @transform_3(%arg0: i32) -> (i32, i32) {
    %c0_i32 = arith.constant 0 : i32
    %c0_i32_0 = arith.constant 0 : i32
    %c0_i32_1 = arith.constant 0 : i32
    return %c0_i32, %c0_i32_0 : i32, i32
  }
  func.func @transform_4(%arg0: i32) -> (i32, i32, i32, i32) {
    %c0_i32 = arith.constant 0 : i32
    %c0_i32_0 = arith.constant 0 : i32
    %c0_i32_1 = arith.constant 0 : i32
    %c0_i32_2 = arith.constant 0 : i32
    return %arg0, %c0_i32, %c0_i32_0, %c0_i32_1 : i32, i32, i32, i32
  }
  func.func @transform_5(%arg0: i32) -> (i32, i32, i32) {
    %c0_i32 = arith.constant 0 : i32
    %c0_i32_0 = arith.constant 0 : i32
    %c0_i32_1 = arith.constant 0 : i32
    return %arg0, %c0_i32, %c0_i32_0 : i32, i32, i32
  }
}

module attributes {stable_mosaic.version = 11 : i64} {
  func.func @_pool_proj_kernel(%arg0: i32, %arg1: memref<2x16x128xf32, #tpu.memory_space<vmem>>, %arg2: memref<1x128xf32, #tpu.memory_space<vmem>>, %arg3: memref<128x256xbf16, #tpu.memory_space<vmem>>, %arg4: memref<2x256xf32, #tpu.memory_space<vmem>>) attributes {dimension_semantics = [#tpu.dimension_semantics<arbitrary>], iteration_bounds = array<i64: 1>, scalar_prefetch = 0 : i64, scratch_operands = 0 : i64, tpu.core_type = #tpu.core_type<tc>, window_params = [{pipeline_mode = #tpu.pipeline_mode<synchronous>, transform_indices = @transform_0, window_bounds = array<i64: 2, 16, 128>}, {pipeline_mode = #tpu.pipeline_mode<synchronous>, transform_indices = @transform_1, window_bounds = array<i64: 1, 128>}, {pipeline_mode = #tpu.pipeline_mode<synchronous>, transform_indices = @transform_2, window_bounds = array<i64: 128, 256>}, {pipeline_mode = #tpu.pipeline_mode<synchronous>, transform_indices = @transform_3, window_bounds = array<i64: 2, 256>}]} {
    %c0 = arith.constant 0 : index
    %c0_0 = arith.constant 0 : index
    %c0_1 = arith.constant 0 : index
    %0 = vector.load %arg1[%c0, %c0_0, %c0_1] : memref<2x16x128xf32, #tpu.memory_space<vmem>>, vector<2x16x128xf32>
    %1 = arith.mulf %0, %0 : vector<2x16x128xf32>
    %cst = arith.constant dense<0.000000e+00> : vector<2x16xf32>
    %2 = vector.multi_reduction <add>, %1, %cst [2] : vector<2x16x128xf32> to vector<2x16xf32>
    %3 = vector.shape_cast %2 : vector<2x16xf32> to vector<2x16x1xf32>
    %cst_2 = arith.constant 1.280000e+02 : f32
    %4 = vector.broadcast %cst_2 : f32 to vector<2x16x1xf32>
    %5 = arith.divf %3, %4 : vector<2x16x1xf32>
    %cst_3 = arith.constant 9.99999997E-7 : f32
    %6 = vector.broadcast %cst_3 : f32 to vector<2x16x1xf32>
    %7 = arith.addf %5, %6 : vector<2x16x1xf32>
    %8 = math.rsqrt %7 : vector<2x16x1xf32>
    %9 = vector.broadcast %8 : vector<2x16x1xf32> to vector<2x16x128xf32>
    %10 = arith.mulf %0, %9 : vector<2x16x128xf32>
    %c0_4 = arith.constant 0 : index
    %c0_5 = arith.constant 0 : index
    %11 = vector.load %arg2[%c0_4, %c0_5] : memref<1x128xf32, #tpu.memory_space<vmem>>, vector<1x128xf32>
    %12 = vector.shape_cast %11 : vector<1x128xf32> to vector<1x1x128xf32>
    %13 = vector.broadcast %12 : vector<1x1x128xf32> to vector<2x16x128xf32>
    %14 = arith.mulf %10, %13 : vector<2x16x128xf32>
    %cst_6 = arith.constant dense<0.000000e+00> : vector<2x128xf32>
    %15 = vector.multi_reduction <add>, %14, %cst_6 [1] : vector<2x16x128xf32> to vector<2x128xf32>
    %cst_7 = arith.constant 1.600000e+01 : f32
    %16 = vector.broadcast %cst_7 : f32 to vector<2x128xf32>
    %17 = arith.divf %15, %16 : vector<2x128xf32>
    %18 = arith.truncf %17 : vector<2x128xf32> to vector<2x128xbf16>
    %c0_8 = arith.constant 0 : index
    %c0_9 = arith.constant 0 : index
    %19 = vector.load %arg3[%c0_8, %c0_9] : memref<128x256xbf16, #tpu.memory_space<vmem>>, vector<128x256xbf16>
    %cst_10 = arith.constant dense<0.000000e+00> : vector<2x256xf32>
    %20 = tpu.matmul %18, %19, %cst_10 {dimension_numbers = #tpu.dot_dimension_numbers<[1], [0], [0], [1], [0, 0, 1, 1], [], []>} : vector<2x128xbf16>, vector<128x256xbf16>, vector<2x256xf32> -> vector<2x256xf32>
    %c0_11 = arith.constant 0 : index
    %c0_12 = arith.constant 0 : index
    %21 = vector.load %arg4[%c0_11, %c0_12] : memref<2x256xf32, #tpu.memory_space<vmem>>, vector<2x256xf32>
    tpu.vector_store %arg4[%c0_11, %c0_12], %20 {strides = array<i32>} : memref<2x256xf32, #tpu.memory_space<vmem>>, vector<2x256xf32>,
    return
  }
  func.func @transform_0(%arg0: i32) -> (i32, i32, i32) {
    %c0_i32 = arith.constant 0 : i32
    %c0_i32_0 = arith.constant 0 : i32
    %c0_i32_1 = arith.constant 0 : i32
    %c0_i32_2 = arith.constant 0 : i32
    return %c0_i32, %c0_i32_0, %c0_i32_1 : i32, i32, i32
  }
  func.func @transform_1(%arg0: i32) -> (i32, i32) {
    %c0_i32 = arith.constant 0 : i32
    %c0_i32_0 = arith.constant 0 : i32
    %c0_i32_1 = arith.constant 0 : i32
    return %c0_i32, %c0_i32_0 : i32, i32
  }
  func.func @transform_2(%arg0: i32) -> (i32, i32) {
    %c0_i32 = arith.constant 0 : i32
    %c0_i32_0 = arith.constant 0 : i32
    %c0_i32_1 = arith.constant 0 : i32
    return %c0_i32, %c0_i32_0 : i32, i32
  }
  func.func @transform_3(%arg0: i32) -> (i32, i32) {
    %c0_i32 = arith.constant 0 : i32
    %c0_i32_0 = arith.constant 0 : i32
    %c0_i32_1 = arith.constant 0 : i32
    return %c0_i32, %c0_i32_0 : i32, i32
  }
}

</mosaic_0001>

<llo_original>
// kernel: prompt_encoder_forward.6
$region0: #{prompt_encoder_forward.6}
  #allocation0 [shape = 'u32[]', space=smem, size = 0x4, offset = 0x4, fixed_abs, tag = 'smem constant byte address 0x4 - core index']
  #allocation1 [shape = 'u32[144,128]{1,0:T(1,128)}', space=vmem, size = 0x12000, scoped, tag = 'internal scratch']
  %s0 = inlined_call_operand.vmem [shape: f32[2,16,128], index: 0, kind: input, shape index: {}]
  %s1 = inlined_call_operand.vmem [shape: f32[1,128], index: 1, kind: input, shape index: {}]
  %s2 = inlined_call_operand.vmem [shape: bf16[128,256], index: 2, kind: input, shape index: {}]
  %s3 = inlined_call_operand.vmem [shape: bf16[256,128], index: 3, kind: input, shape index: {}]
  %s4 = inlined_call_operand.vmem [shape: f32[2,16,128], index: 4, kind: output, shape index: {}]
  %s5 = sld [smem:[#allocation0]]
  $region49: #{prompt_encoder_forward.6} parent=0
    _
  %s7 = ssub.s32 1, %s5
  %s8 = scalar_select 0, %s7, %s5
  loop: start=0, step=1, limit=4
  $region2: #{prompt_encoder_forward.6} parent=0 // loop_pre_header
    _
  $region3: #{prompt_encoder_forward.6} parent=0 // loop_header
    %s10 = sphi 0, %s14
    %p11 = scmp.ge.s32.totalorder %s10, 4
    %s20 = sphi 0, %s22
    %s23 = sphi 0, %s20
    %s24 = sphi 0, %s23
    %s40 = sphi 0, %s24
    %s44 = sphi 0, %s44
    %s46 = sphi 0, %s44
    %s47 = sphi 0, %s46
    %s61 = sphi 0, %s47
    %s65 = sphi 0, %s65
    %s67 = sphi 0, %s65
    %s68 = sphi 0, %s67
    %s82 = sphi 0, %s68
    %s86 = sphi 0, %s86
    %s88 = sphi 0, %s86
    %s89 = sphi 0, %s88
    %s103 = sphi 0, %s89
    %s109 = sphi 0, %s111
    %s112 = sphi 0, %s109
    %s113 = sphi 0, %s112
    %s129 = sphi 0, %s113
  $region4: #{prompt_encoder_forward.6} parent=0 // loop_header_branch
    %13 = sbr.rel (%p11) target = $region8
  $region5: #{prompt_encoder_forward.6} parent=0 // loop_body
    %s15 = ssub.s32 %s10, 1
    %s16 = ssub.s32 %s10, 2
    %s17 = sadd.s32 %s10, 1
    %s18 = ssub.s32 %s10, %s17
    %p19 = scmp.eq.s32.totalorder %s18, 0
    %s21 = sadd.s32 %s20, 1
    %s22 = scalar_select %p19, %s20, %s21
    %p25 = pneg %p19
    %p26 = scmp.eq.s32.totalorder %s10, 1
    %p27 = por %p25, %p26
    %p28 = scmp.ne.s32.totalorder %s20, %s23
    %p29 = scmp.eq.s32.totalorder %s10, 0
    %p30 = por %p28, %p29
    %p31 = scmp.ne.s32.totalorder %s20, %s23
    %p32 = scmp.eq.s32.totalorder %s15, 1
    %p33 = por %p31, %p32
    %p34 = scmp.ne.s32.totalorder %s23, %s24
    %p35 = scmp.eq.s32.totalorder %s15, 0
    %p36 = por %p34, %p35
    %p37 = scmp.ne.s32.totalorder %s23, %s24
    %p38 = scmp.eq.s32.totalorder %s16, 1
    %p39 = por %p37, %p38
    %p41 = scmp.ne.s32.totalorder %s24, %s40
    %p42 = scmp.eq.s32.totalorder %s16, 0
    %p43 = por %p41, %p42
    %s45 = sadd.s32 %s44, 1
    %p48 = scmp.eq.s32.totalorder %s10, 1
    %p49 = scmp.ne.s32.totalorder %s44, %s46
    %p50 = scmp.eq.s32.totalorder %s10, 0
    %p51 = por %p49, %p50
    %p52 = scmp.ne.s32.totalorder %s44, %s46
    %p53 = scmp.eq.s32.totalorder %s15, 1
    %p54 = por %p52, %p53
    %p55 = scmp.ne.s32.totalorder %s46, %s47
    %p56 = scmp.eq.s32.totalorder %s15, 0
    %p57 = por %p55, %p56
    %p58 = scmp.ne.s32.totalorder %s46, %s47
    %p59 = scmp.eq.s32.totalorder %s16, 1
    %p60 = por %p58, %p59
    %p62 = scmp.ne.s32.totalorder %s47, %s61
    %p63 = scmp.eq.s32.totalorder %s16, 0
    %p64 = por %p62, %p63
    %s66 = sadd.s32 %s65, 1
    %p69 = scmp.eq.s32.totalorder %s10, 1
    %p70 = scmp.ne.s32.totalorder %s65, %s67
    %p71 = scmp.eq.s32.totalorder %s10, 0
    %p72 = por %p70, %p71
    %p73 = scmp.ne.s32.totalorder %s65, %s67
    %p74 = scmp.eq.s32.totalorder %s15, 1
    %p75 = por %p73, %p74
    %p76 = scmp.ne.s32.totalorder %s67, %s68
    %p77 = scmp.eq.s32.totalorder %s15, 0
    %p78 = por %p76, %p77
    %p79 = scmp.ne.s32.totalorder %s67, %s68
    %p80 = scmp.eq.s32.totalorder %s16, 1
    %p81 = por %p79, %p80
    %p83 = scmp.ne.s32.totalorder %s68, %s82
    %p84 = scmp.eq.s32.totalorder %s16, 0
    %p85 = por %p83, %p84
    %s87 = sadd.s32 %s86, 1
    %p90 = scmp.eq.s32.totalorder %s10, 1
    %p91 = scmp.ne.s32.totalorder %s86, %s88
    %p92 = scmp.eq.s32.totalorder %s10, 0
    %p93 = por %p91, %p92
    %p94 = scmp.ne.s32.totalorder %s86, %s88
    %p95 = scmp.eq.s32.totalorder %s15, 1
    %p96 = por %p94, %p95
    %p97 = scmp.ne.s32.totalorder %s88, %s89
    %p98 = scmp.eq.s32.totalorder %s15, 0
    %p99 = por %p97, %p98
    %p100 = scmp.ne.s32.totalorder %s88, %s89
    %p101 = scmp.eq.s32.totalorder %s16, 1
    %p102 = por %p100, %p101
    %p104 = scmp.ne.s32.totalorder %s89, %s103
    %p105 = scmp.eq.s32.totalorder %s16, 0
    %p106 = por %p104, %p105
    %s107 = ssub.s32 %s10, %s17
    %p108 = scmp.eq.s32.totalorder %s107, 0
    %s110 = sadd.s32 %s109, 1
    %s111 = scalar_select %p108, %s109, %s110
    %p114 = pneg %p108
    %p115 = scmp.eq.s32.totalorder %s10, 1
    %p116 = por %p114, %p115
    %p117 = scmp.ne.s32.totalorder %s109, %s112
    %p118 = scmp.eq.s32.totalorder %s10, 0
    %p119 = por %p117, %p118
    %p120 = scmp.ne.s32.totalorder %s109, %s112
    %p121 = scmp.eq.s32.totalorder %s15, 1
    %p122 = por %p120, %p121
    %p123 = scmp.ne.s32.totalorder %s112, %s113
    %p124 = scmp.eq.s32.totalorder %s15, 0
    %p125 = por %p123, %p124
    %p126 = scmp.ne.s32.totalorder %s112, %s113
    %p127 = scmp.eq.s32.totalorder %s16, 1
    %p128 = por %p126, %p127
    %p130 = scmp.ne.s32.totalorder %s113, %s129
    %p131 = scmp.eq.s32.totalorder %s16, 0
    %p132 = por %p130, %p131
    %p133 = scmp.le.s32.totalorder 1, %s10
    %p134 = scmp.lt.s32.totalorder %s10, 3
    %p135 = pnand %p133, %p134
    %p136 = pneg %p135
    // Predicated region
    $region9: #{prompt_encoder_forward.6} parent=5 // pred_check
      _
    $region10: #{prompt_encoder_forward.6} parent=5 // pred_check_branch
      %138 = sbr.rel (%p135) target = $region12
    $region11: #{prompt_encoder_forward.6} parent=5 // pred_region
      %s139 = ssub.s32 %s10, 1
      // Predicated region
      $region13: #{prompt_encoder_forward.6} parent=11 // pred_check
        %p140 = pneg %p57
      $region14: #{prompt_encoder_forward.6} parent=11 // pred_check_branch
        %142 = sbr.rel (%p140) target = $region16
      $region15: #{prompt_encoder_forward.6} parent=11 // pred_region
        _
      $region16: #{prompt_encoder_forward.6} parent=11 // pred_fallthru
        _
      // Predicated region
      $region17: #{prompt_encoder_forward.6} parent=11 // pred_check
        %p143 = pneg %p78
      $region18: #{prompt_encoder_forward.6} parent=11 // pred_check_branch
        %145 = sbr.rel (%p143) target = $region20
      $region19: #{prompt_encoder_forward.6} parent=11 // pred_region
        _
      $region20: #{prompt_encoder_forward.6} parent=11 // pred_fallthru
        _
      // Predicated region
      $region21: #{prompt_encoder_forward.6} parent=11 // pred_check
        %p146 = pneg %p99
      $region22: #{prompt_encoder_forward.6} parent=11 // pred_check_branch
        %148 = sbr.rel (%p146) target = $region24
      $region23: #{prompt_encoder_forward.6} parent=11 // pred_region
        _
      $region24: #{prompt_encoder_forward.6} parent=11 // pred_fallthru
        _
    $region12: #{prompt_encoder_forward.6} parent=5 // pred_fallthru
      _
    %p149 = scmp.lt.s32.totalorder %s10, 2
    // Predicated region
    $region25: #{prompt_encoder_forward.6} parent=5 // pred_check
      %p150 = pneg %p149
    $region26: #{prompt_encoder_forward.6} parent=5 // pred_check_branch
      %152 = sbr.rel (%p150) target = $region28
    $region27: #{prompt_encoder_forward.6} parent=5 // pred_region
      // Predicated region
      $region29: #{prompt_encoder_forward.6} parent=27 // pred_check
        %p153 = pneg %p30
      $region30: #{prompt_encoder_forward.6} parent=27 // pred_check_branch
        %155 = sbr.rel (%p153) target = $region32
      $region31: #{prompt_encoder_forward.6} parent=27 // pred_region
        %p156 = scmp.lt.s32.totalorder %s10, 1
        %s157 = scalar_select %p156, %s10, 1
        %s158 = smul.addr %s157, 2
        %s159 = smul.addr %s158, 8
        %s160 = scalar_lea.vmem %s0, %s159
      $region32: #{prompt_encoder_forward.6} parent=27 // pred_fallthru
        _
    $region28: #{prompt_encoder_forward.6} parent=5 // pred_fallthru
      _
    %p161 = scmp.le.s32.totalorder 1, %s10
    %p162 = scmp.lt.s32.totalorder %s10, 3
    %p163 = pnand %p161, %p162
    %p164 = pneg %p163
    // Predicated region
    $region33: #{prompt_encoder_forward.6} parent=5 // pred_check
      _
    $region34: #{prompt_encoder_forward.6} parent=5 // pred_check_branch
      %166 = sbr.rel (%p163) target = $region36
    $region35: #{prompt_encoder_forward.6} parent=5 // pred_region
      %s167 = ssub.s32 %s10, 1
      %p168 = scmp.lt.s32.totalorder %s15, 1
      %s169 = scalar_select %p168, %s15, 1
      %s170 = smul.addr %s169, 2
      %s171 = smul.addr %s170, 8
      %s172 = scalar_lea.vmem %s0, %s171
      %p173 = pneg %p36
      %p174 = pneg %p33
      %p175 = pneg %p57
      %p176 = pneg %p54
      %p177 = pneg %p78
      %p178 = pneg %p75
      %p179 = pneg %p99
      %p180 = pneg %p96
      %p181 = pneg %p125
      %p182 = pneg %p122
      %p183 = scmp.lt.s32.totalorder %s15, 1
      %s184 = scalar_select %p183, %s15, 1
      %s185 = smul.addr %s184, 2
      %s186 = smul.addr %s185, 8
      %s187 = scalar_lea.vmem %s4, %s186
      %p188 = scmp.lt.s32.totalorder %s15, 1
      %s189 = scalar_select %p188, %s15, 1
      %s190 = smul.addr %s189, 2
      %s191 = smul.addr %s190, 8
      %s192 = scalar_lea.vmem %s0, %s191
      %p193 = scmp.lt.s32.totalorder %s15, 1
      %s194 = scalar_select %p193, %s15, 1
      %s195 = smul.addr %s194, 2
      %s196 = smul.addr %s195, 8
      %s197 = scalar_lea.vmem %s4, %s196
      %v199 = vld [vmem:[%s192] sm:$0xff]
      %v200 = vld [vmem:[%s192 + $0x8] sm:$0xff]
      %v201 = vmul.f32 %v199, %v199
      %v202 = vmul.f32 %v200, %v200
      %203 = vadd.xlane.f32.xlu0 %v201
      %v204 = vpop.xlane.xlu0 %203
      %205 = vadd.xlane.f32.xlu0 %v202
      %v206 = vpop.xlane.xlu0 %205
      %v207 = vrcp.pop 128.0
      %v208 = vmul.f32 %v204, %v207
      %v209 = vmul.f32 %v206, %v207
      %v210 = vadd.f32 %v208, 1e-06
      %v211 = vadd.f32 %v209, 1e-06
      %v212 = vrsqrt.pop %v210
      %v213 = vrsqrt.pop %v211
      %v214 = vmul.f32 %v199, %v212
      %v215 = vmul.f32 %v200, %v213
      %v216 = vld [vmem:[%s1] sm:$0x1]
      %v218 = vlaneseq
      %v219 = vshrl.u32 %v218, 7
      %v220 = vsub.s32 0, %v219
      %v221 = vrot.slane %v216, %v220
      %v223 = vmul.f32 %v214, %v221
      %v224 = vmul.f32 %v215, %v221
      %v225 = vpack.c.bf16 %v224, %v223
      %v226 = vld [vmem:[%s2] sm:$0xff]
      %v227 = vld [vmem:[%s2 + $0x8] sm:$0xff]
      %v228 = vld [vmem:[%s2 + $0x10] sm:$0xff]
      %v229 = vld [vmem:[%s2 + $0x18] sm:$0xff]
      %v230 = vld [vmem:[%s2 + $0x20] sm:$0xff]
      %v231 = vld [vmem:[%s2 + $0x28] sm:$0xff]
      %v232 = vld [vmem:[%s2 + $0x30] sm:$0xff]
      %v233 = vld [vmem:[%s2 + $0x38] sm:$0xff]
      %v234 = vld [vmem:[%s2 + $0x40] sm:$0xff]
      %v235 = vld [vmem:[%s2 + $0x48] sm:$0xff]
      %v236 = vld [vmem:[%s2 + $0x50] sm:$0xff]
      %v237 = vld [vmem:[%s2 + $0x58] sm:$0xff]
      %v238 = vld [vmem:[%s2 + $0x60] sm:$0xff]
      %v239 = vld [vmem:[%s2 + $0x68] sm:$0xff]
      %v240 = vld [vmem:[%s2 + $0x70] sm:$0xff]
      %v241 = vld [vmem:[%s2 + $0x78] sm:$0xff]
      %v258 = vunpack.c.l.b16 %v226
      %v259 = vunpack.c.h.b16 %v226
      %v260 = vunpack.c.l.b16 %v227
      %v261 = vunpack.c.h.b16 %v227
      %v262 = vunpack.c.l.b16 %v228
      %v263 = vunpack.c.h.b16 %v228
      %v264 = vunpack.c.l.b16 %v229
      %v265 = vunpack.c.h.b16 %v229
      %v266 = vunpack.c.l.b16 %v230
      %v267 = vunpack.c.h.b16 %v230
      %v268 = vunpack.c.l.b16 %v231
      %v269 = vunpack.c.h.b16 %v231
      %v270 = vunpack.c.l.b16 %v232
      %v271 = vunpack.c.h.b16 %v232
      %v272 = vunpack.c.l.b16 %v233
      %v273 = vunpack.c.h.b16 %v233
      %v274 = vunpack.c.l.b16 %v234
      %v275 = vunpack.c.h.b16 %v234
      %v276 = vunpack.c.l.b16 %v235
      %v277 = vunpack.c.h.b16 %v235
      %v278 = vunpack.c.l.b16 %v236
      %v279 = vunpack.c.h.b16 %v236
      %v280 = vunpack.c.l.b16 %v237
      %v281 = vunpack.c.h.b16 %v237
      %v282 = vunpack.c.l.b16 %v238
      %v283 = vunpack.c.h.b16 %v238
      %v284 = vunpack.c.l.b16 %v239
      %v285 = vunpack.c.h.b16 %v239
      %v286 = vunpack.c.l.b16 %v240
      %v287 = vunpack.c.h.b16 %v240
      %v288 = vunpack.c.l.b16 %v241
      %v289 = vunpack.c.h.b16 %v241
      %v290 = vpack.c.b16 %v260, %v258
      %v291 = vpack.c.b16 %v261, %v259
      %v292 = vpack.c.b16 %v264, %v262
      %v293 = vpack.c.b16 %v265, %v263
      %v294 = vpack.c.b16 %v268, %v266
      %v295 = vpack.c.b16 %v269, %v267
      %v296 = vpack.c.b16 %v272, %v270
      %v297 = vpack.c.b16 %v273, %v271
      %v298 = vpack.c.b16 %v276, %v274
      %v299 = vpack.c.b16 %v277, %v275
      %v300 = vpack.c.b16 %v280, %v278
      %v301 = vpack.c.b16 %v281, %v279
      %v302 = vpack.c.b16 %v284, %v282
      %v303 = vpack.c.b16 %v285, %v283
      %v304 = vpack.c.b16 %v288, %v286
      %v305 = vpack.c.b16 %v289, %v287
      %322 = vmatprep.subr.bf16.mxu0 %v291
      %323 = vmatpush1.bf16.msra.mxu0 %v290
      %324 = vmatprep.subr.bf16.mxu0 %v293
      %325 = vmatpush1.bf16.msra.mxu0 %v292
      %326 = vmatprep.subr.bf16.mxu0 %v295
      %327 = vmatpush1.bf16.msra.mxu0 %v294
      %328 = vmatprep.subr.bf16.mxu0 %v297
      %329 = vmatpush1.bf16.msra.mxu0 %v296
      %330 = vmatprep.subr.bf16.mxu0 %v299
      %331 = vmatpush1.bf16.msra.mxu0 %v298
      %332 = vmatprep.subr.bf16.mxu0 %v301
      %333 = vmatpush1.bf16.msra.mxu0 %v300
      %334 = vmatprep.subr.bf16.mxu0 %v303
      %335 = vmatpush1.bf16.msra.mxu0 %v302
      %336 = vmatprep.subr.bf16.mxu0 %v305
      %337 = vmatpush1.bf16.msra.mxu0 %v304
      %338 = vmatprep.subr.bf16.mxu0 0
      %339 = vmatpush1.bf16.msra.mxu0 0
      %340 = vmatprep.subr.bf16.mxu0 0
      %341 = vmatpush1.bf16.msra.mxu0 0
      %342 = vmatprep.subr.bf16.mxu0 0
      %343 = vmatpush1.bf16.msra.mxu0 0
      %344 = vmatprep.subr.bf16.mxu0 0
      %345 = vmatpush1.bf16.msra.mxu0 0
      %346 = vmatprep.subr.bf16.mxu0 0
      %347 = vmatpush1.bf16.msra.mxu0 0
      %348 = vmatprep.subr.bf16.mxu0 0
      %349 = vmatpush1.bf16.msra.mxu0 0
      %350 = vmatprep.subr.bf16.mxu0 0
      %351 = vmatpush1.bf16.msra.mxu0 0
      %352 = vmatprep.subr.bf16.mxu0 0
      %353 = vmatpush1.bf16.msra.mxu0 0
      %354 = vmatprep.mubr.bf16.mxu0 0
      %355 = vmatmul.mubr.bf16.gmra.mrb[0].mxu0 %v225
      %v356 = vpop.f32.mrb[0].mxu0
      %v357 = vadd.f32 0.0, %v356
      %v358 = vpop.f32.mrb[0].mxu0
      %v359 = vadd.f32 0.0, %v358
      %v360 = vpop.f32.mrb[0].mxu0
      %v361 = vadd.f32 0.0, %v360
      %v362 = vpop.f32.mrb[0].mxu0
      %v363 = vadd.f32 0.0, %v362
      %364 = vdwg.mxu0
      %v365 = vmax.f32 %v357, 0.0
      %v366 = vmax.f32 %v359, 0.0
      %v367 = vmax.f32 %v361, 0.0
      %v368 = vmax.f32 %v363, 0.0
      %v369 = vpack.c.bf16 %v367, %v365
      %v370 = vpack.c.bf16 %v368, %v366
      %v371 = vld [vmem:[%s3] sm:$0xf]
      %v372 = vld [vmem:[%s3 + $0x4] sm:$0xf]
      %v373 = vld [vmem:[%s3 + $0x8] sm:$0xf]
      %v374 = vld [vmem:[%s3 + $0xc] sm:$0xf]
      %v375 = vld [vmem:[%s3 + $0x10] sm:$0xf]
      %v376 = vld [vmem:[%s3 + $0x14] sm:$0xf]
      %v377 = vld [vmem:[%s3 + $0x18] sm:$0xf]
      %v378 = vld [vmem:[%s3 + $0x1c] sm:$0xf]
      %v379 = vld [vmem:[%s3 + $0x20] sm:$0xf]
      %v380 = vld [vmem:[%s3 + $0x24] sm:$0xf]
      %v381 = vld [vmem:[%s3 + $0x28] sm:$0xf]
      %v382 = vld [vmem:[%s3 + $0x2c] sm:$0xf]
      %v383 = vld [vmem:[%s3 + $0x30] sm:$0xf]
      %v384 = vld [vmem:[%s3 + $0x34] sm:$0xf]
      %v385 = vld [vmem:[%s3 + $0x38] sm:$0xf]
      %v386 = vld [vmem:[%s3 + $0x3c] sm:$0xf]
      %v387 = vld [vmem:[%s3 + $0x40] sm:$0xf]
      %v388 = vld [vmem:[%s3 + $0x44] sm:$0xf]
      %v389 = vld [vmem:[%s3 + $0x48] sm:$0xf]
      %v390 = vld [vmem:[%s3 + $0x4c] sm:$0xf]
      %v391 = vld [vmem:[%s3 + $0x50] sm:$0xf]
      %v392 = vld [vmem:[%s3 + $0x54] sm:$0xf]
      %v393 = vld [vmem:[%s3 + $0x58] sm:$0xf]
      %v394 = vld [vmem:[%s3 + $0x5c] sm:$0xf]
      %v395 = vld [vmem:[%s3 + $0x60] sm:$0xf]
      %v396 = vld [vmem:[%s3 + $0x64] sm:$0xf]
      %v397 = vld [vmem:[%s3 + $0x68] sm:$0xf]
      %v398 = vld [vmem:[%s3 + $0x6c] sm:$0xf]
      %v399 = vld [vmem:[%s3 + $0x70] sm:$0xf]
      %v400 = vld [vmem:[%s3 + $0x74] sm:$0xf]
      %v401 = vld [vmem:[%s3 + $0x78] sm:$0xf]
      %v402 = vld [vmem:[%s3 + $0x7c] sm:$0xf]
      %v435 = vunpack.c.l.b16 %v371
      %v436 = vunpack.c.l.b16 %v372
      %v437 = vunpack.c.l.b16 %v373
      %v438 = vunpack.c.l.b16 %v374
      %v439 = vunpack.c.l.b16 %v375
      %v440 = vunpack.c.l.b16 %v376
      %v441 = vunpack.c.l.b16 %v377
      %v442 = vunpack.c.l.b16 %v378
      %v443 = vunpack.c.l.b16 %v379
      %v444 = vunpack.c.l.b16 %v380
      %v445 = vunpack.c.l.b16 %v381
      %v446 = vunpack.c.l.b16 %v382
      %v447 = vunpack.c.l.b16 %v383
      %v448 = vunpack.c.l.b16 %v384
      %v449 = vunpack.c.l.b16 %v385
      %v450 = vunpack.c.l.b16 %v386
      %v451 = vunpack.c.l.b16 %v387
      %v452 = vunpack.c.l.b16 %v388
      %v453 = vunpack.c.l.b16 %v389
      %v454 = vunpack.c.l.b16 %v390
      %v455 = vunpack.c.l.b16 %v391
      %v456 = vunpack.c.l.b16 %v392
      %v457 = vunpack.c.l.b16 %v393
      %v458 = vunpack.c.l.b16 %v394
      %v459 = vunpack.c.l.b16 %v395
      %v460 = vunpack.c.l.b16 %v396
      %v461 = vunpack.c.l.b16 %v397
      %v462 = vunpack.c.l.b16 %v398
      %v463 = vunpack.c.l.b16 %v399
      %v464 = vunpack.c.l.b16 %v400
      %v465 = vunpack.c.l.b16 %v401
      %v466 = vunpack.c.l.b16 %v402
      %v467 = vpack.c.b16 %v436, %v435
      %v468 = vpack.c.b16 %v438, %v437
      %v469 = vpack.c.b16 %v440, %v439
      %v470 = vpack.c.b16 %v442, %v441
      %v471 = vpack.c.b16 %v444, %v443
      %v472 = vpack.c.b16 %v446, %v445
      %v473 = vpack.c.b16 %v448, %v447
      %v474 = vpack.c.b16 %v450, %v449
      %v475 = vpack.c.b16 %v452, %v451
      %v476 = vpack.c.b16 %v454, %v453
      %v477 = vpack.c.b16 %v456, %v455
      %v478 = vpack.c.b16 %v458, %v457
      %v479 = vpack.c.b16 %v460, %v459
      %v480 = vpack.c.b16 %v462, %v461
      %v481 = vpack.c.b16 %v464, %v463
      %v482 = vpack.c.b16 %v466, %v465
      %499 = vmatprep.subr.bf16.mxu0 0
      %500 = vmatpush1.bf16.msra.mxu0 %v467
      %501 = vmatprep.subr.bf16.mxu0 0
      %502 = vmatpush1.bf16.msra.mxu0 %v468
      %503 = vmatprep.subr.bf16.mxu0 0
      %504 = vmatpush1.bf16.msra.mxu0 %v469
      %505 = vmatprep.subr.bf16.mxu0 0
      %506 = vmatpush1.bf16.msra.mxu0 %v470
      %507 = vmatprep.subr.bf16.mxu0 0
      %508 = vmatpush1.bf16.msra.mxu0 %v471
      %509 = vmatprep.subr.bf16.mxu0 0
      %510 = vmatpush1.bf16.msra.mxu0 %v472
      %511 = vmatprep.subr.bf16.mxu0 0
      %512 = vmatpush1.bf16.msra.mxu0 %v473
      %513 = vmatprep.subr.bf16.mxu0 0
      %514 = vmatpush1.bf16.msra.mxu0 %v474
      %515 = vmatprep.subr.bf16.mxu0 0
      %516 = vmatpush1.bf16.msra.mxu0 %v475
      %517 = vmatprep.subr.bf16.mxu0 0
      %518 = vmatpush1.bf16.msra.mxu0 %v476
      %519 = vmatprep.subr.bf16.mxu0 0
      %520 = vmatpush1.bf16.msra.mxu0 %v477
      %521 = vmatprep.subr.bf16.mxu0 0
      %522 = vmatpush1.bf16.msra.mxu0 %v478
      %523 = vmatprep.subr.bf16.mxu0 0
      %524 = vmatpush1.bf16.msra.mxu0 %v479
      %525 = vmatprep.subr.bf16.mxu0 0
      %526 = vmatpush1.bf16.msra.mxu0 %v480
      %527 = vmatprep.subr.bf16.mxu0 0
      %528 = vmatpush1.bf16.msra.mxu0 %v481
      %529 = vmatprep.subr.bf16.mxu0 0
      %530 = vmatpush1.bf16.msra.mxu0 %v482
      %531 = vmatprep.mubr.bf16.mxu0 %v370
      %532 = vmatmul.mubr.bf16.gmra.mrb[0].mxu0 %v369
      %v533 = vpop.f32.mrb[0].mxu0
      %v534 = vadd.f32 0.0, %v533
      %v535 = vpop.f32.mrb[0].mxu0
      %v536 = vpop.f32.mrb[0].mxu0
      %v537 = vadd.f32 0.0, %v536
      %v538 = vpop.f32.mrb[0].mxu0
      %539 = vdwg.mxu0
      %v540 = vadd.f32 %v199, %v534
      %v541 = vadd.f32 %v200, %v537
      %542 = vst [vmem:[%s197] sm:$0xff] %v540
      %543 = vst [vmem:[%s197 + $0x8] sm:$0xff] %v541
      %p544 = scmp.lt.s32.totalorder %s15, 1
      %s545 = scalar_select %p544, %s15, 1
      %s546 = smul.addr %s545, 2
      %s547 = smul.addr %s546, 8
      %s548 = scalar_lea.vmem %s4, %s547
      // Predicated region
      $region37: #{prompt_encoder_forward.6} parent=35 // pred_check
        %p549 = pneg %p122
      $region38: #{prompt_encoder_forward.6} parent=35 // pred_check_branch
        %551 = sbr.rel (%p549) target = $region40
      $region39: #{prompt_encoder_forward.6} parent=35 // pred_region
        _
      $region40: #{prompt_encoder_forward.6} parent=35 // pred_fallthru
        _
    $region36: #{prompt_encoder_forward.6} parent=5 // pred_fallthru
      _
    %p552 = scmp.le.s32.totalorder 2, %s10
    // Predicated region
    $region41: #{prompt_encoder_forward.6} parent=5 // pred_check
      %p553 = pneg %p552
    $region42: #{prompt_encoder_forward.6} parent=5 // pred_check_branch
      %555 = sbr.rel (%p553) target = $region44
    $region43: #{prompt_encoder_forward.6} parent=5 // pred_region
      %s556 = ssub.s32 %s10, 2
      // Predicated region
      $region45: #{prompt_encoder_forward.6} parent=43 // pred_check
        %p557 = pneg %p128
      $region46: #{prompt_encoder_forward.6} parent=43 // pred_check_branch
        %559 = sbr.rel (%p557) target = $region48
      $region47: #{prompt_encoder_forward.6} parent=43 // pred_region
        %p560 = scmp.lt.s32.totalorder %s16, 1
        %s561 = scalar_select %p560, %s16, 1
        %s562 = smul.addr %s561, 2
        %s563 = smul.addr %s562, 8
        %s564 = scalar_lea.vmem %s4, %s563
      $region48: #{prompt_encoder_forward.6} parent=43 // pred_fallthru
        _
    $region44: #{prompt_encoder_forward.6} parent=5 // pred_fallthru
      _
  $region6: #{prompt_encoder_forward.6} parent=0 // loop_footer
    %s14 = sadd.s32 1, %s10
  $region7: #{prompt_encoder_forward.6} parent=0 // loop_footer_branch
    %9 = sbr.rel target = $region3
  $region8: #{prompt_encoder_forward.6} parent=0 // loop_exit
    _

// kernel: prompt_encoder_forward.9
$region0: #{prompt_encoder_forward.9}
  #allocation0 [shape = 'u32[]', space=smem, size = 0x4, offset = 0x4, fixed_abs, tag = 'smem constant byte address 0x4 - core index']
  #allocation1 [shape = 'u32[144,128]{1,0:T(1,128)}', space=vmem, size = 0x12000, scoped, tag = 'internal scratch']
  %s0 = inlined_call_operand.vmem [shape: f32[2,16,128], index: 0, kind: input, shape index: {}]
  %s1 = inlined_call_operand.vmem [shape: f32[1,128], index: 1, kind: input, shape index: {}]
  %s2 = inlined_call_operand.vmem [shape: bf16[128,256], index: 2, kind: input, shape index: {}]
  %s3 = inlined_call_operand.hbm [shape: f32[2,256], index: 3, kind: output, shape index: {}]
  %s4 = sld [smem:[#allocation0]]
  $region22: #{prompt_encoder_forward.9} parent=0
    _
  %s6 = ssub.s32 1, %s4
  %s7 = scalar_select 0, %s6, %s4
  $region1: #{prompt_encoder_forward.9} parent=0
    #allocation2 [shape = 'u8[2048]{0}', space=vmem, size = 0x800, scoped, tag = 'output window, operand 0, single buffered']
    #allocation3 [shape = 's32[1]{0}', space=sflag, size = 0x4, scoped, tag = 'scoped memory for prompt_encoder_forward.9']
    %8 = vsyncpa [#allocation3], 0
    // Predicated region
    $region2: #{prompt_encoder_forward.9} parent=1 // pred_check
      _
    $region3: #{prompt_encoder_forward.9} parent=1 // pred_check_branch
      %10 = sbr.rel (0) target = $region5
    $region4: #{prompt_encoder_forward.9} parent=1 // pred_region
      _
    $region5: #{prompt_encoder_forward.9} parent=1 // pred_fallthru
      _
    // Predicated region
    $region6: #{prompt_encoder_forward.9} parent=1 // pred_check
      _
    $region7: #{prompt_encoder_forward.9} parent=1 // pred_check_branch
      %12 = sbr.rel (0) target = $region9
    $region8: #{prompt_encoder_forward.9} parent=1 // pred_region
      _
    $region9: #{prompt_encoder_forward.9} parent=1 // pred_fallthru
      _
    // Predicated region
    $region10: #{prompt_encoder_forward.9} parent=1 // pred_check
      _
    $region11: #{prompt_encoder_forward.9} parent=1 // pred_check_branch
      %14 = sbr.rel (0) target = $region13
    $region12: #{prompt_encoder_forward.9} parent=1 // pred_region
      _
    $region13: #{prompt_encoder_forward.9} parent=1 // pred_fallthru
      _
    %v16 = vld [vmem:[%s0] sm:$0xff]
    %v17 = vld [vmem:[%s0 + $0x8] sm:$0xff]
    %v18 = vld [vmem:[%s0 + $0x10] sm:$0xff]
    %v19 = vld [vmem:[%s0 + $0x18] sm:$0xff]
    %v20 = vmul.f32 %v16, %v16
    %v21 = vmul.f32 %v17, %v17
    %v22 = vmul.f32 %v18, %v18
    %v23 = vmul.f32 %v19, %v19
    %24 = vadd.xlane.f32.xlu0 %v20
    %v25 = vpop.xlane.xlu0 %24
    %26 = vadd.xlane.f32.xlu0 %v21
    %v27 = vpop.xlane.xlu0 %26
    %28 = vadd.xlane.f32.xlu0 %v22
    %v29 = vpop.xlane.xlu0 %28
    %30 = vadd.xlane.f32.xlu0 %v23
    %v31 = vpop.xlane.xlu0 %30
    %v32 = vrcp.pop 128.0
    %v33 = vmul.f32 %v25, %v32
    %v34 = vmul.f32 %v27, %v32
    %v35 = vmul.f32 %v29, %v32
    %v36 = vmul.f32 %v31, %v32
    %v37 = vadd.f32 %v33, 1e-06
    %v38 = vadd.f32 %v34, 1e-06
    %v39 = vadd.f32 %v35, 1e-06
    %v40 = vadd.f32 %v36, 1e-06
    %v41 = vrsqrt.pop %v37
    %v42 = vrsqrt.pop %v38
    %v43 = vrsqrt.pop %v39
    %v44 = vrsqrt.pop %v40
    %v45 = vmul.f32 %v16, %v41
    %v46 = vmul.f32 %v17, %v42
    %v47 = vmul.f32 %v18, %v43
    %v48 = vmul.f32 %v19, %v44
    %v49 = vld [vmem:[%s1] sm:$0x1]
    %v51 = vlaneseq
    %v52 = vshrl.u32 %v51, 7
    %v53 = vsub.s32 0, %v52
    %v54 = vrot.slane %v49, %v53
    %v56 = vmul.f32 %v45, %v54
    %v57 = vmul.f32 %v46, %v54
    %v58 = vmul.f32 %v47, %v54
    %v59 = vmul.f32 %v48, %v54
    %v60 = vadd.f32 %v56, %v57
    %v61 = vrot.slane %v60, 4
    %v62 = vadd.f32 %v60, %v61
    %v63 = vrot.slane %v62, 2
    %v64 = vadd.f32 %v62, %v63
    %v65 = vrot.slane %v64, 1
    %v66 = vadd.f32 %v64, %v65
    %v67 = vadd.f32 %v58, %v59
    %v68 = vrot.slane %v67, 4
    %v69 = vadd.f32 %v67, %v68
    %v70 = vrot.slane %v69, 2
    %v71 = vadd.f32 %v69, %v70
    %v72 = vrot.slane %v71, 1
    %v73 = vadd.f32 %v71, %v72
    %v74 = vrcp.pop 16.0
    %v75 = vmul.f32 %v66, %v74
    %v76 = vmul.f32 %v73, %v74
    %v77 = vpack.c.bf16 %v75, %v75
    %v78 = vpack.c.bf16 %v76, %v76
    %v79 = vld [vmem:[%s2] sm:$0xff]
    %v80 = vld [vmem:[%s2 + $0x8] sm:$0xff]
    %v81 = vld [vmem:[%s2 + $0x10] sm:$0xff]
    %v82 = vld [vmem:[%s2 + $0x18] sm:$0xff]
    %v83 = vld [vmem:[%s2 + $0x20] sm:$0xff]
    %v84 = vld [vmem:[%s2 + $0x28] sm:$0xff]
    %v85 = vld [vmem:[%s2 + $0x30] sm:$0xff]
    %v86 = vld [vmem:[%s2 + $0x38] sm:$0xff]
    %v87 = vld [vmem:[%s2 + $0x40] sm:$0xff]
    %v88 = vld [vmem:[%s2 + $0x48] sm:$0xff]
    %v89 = vld [vmem:[%s2 + $0x50] sm:$0xff]
    %v90 = vld [vmem:[%s2 + $0x58] sm:$0xff]
    %v91 = vld [vmem:[%s2 + $0x60] sm:$0xff]
    %v92 = vld [vmem:[%s2 + $0x68] sm:$0xff]
    %v93 = vld [vmem:[%s2 + $0x70] sm:$0xff]
    %v94 = vld [vmem:[%s2 + $0x78] sm:$0xff]
    %v97 = vunpack.c.l.b16 %v77
    %v98 = vunpack.c.l.b16 %v78
    %vm99 = vcmask 1041409
    %v100 = vsel %vm99, %v98, %v97
    %v101 = vpack.c.b16 %v100, %v100
    %v119 = vunpack.c.l.b16 %v79
    %v120 = vunpack.c.h.b16 %v79
    %v121 = vunpack.c.l.b16 %v80
    %v122 = vunpack.c.h.b16 %v80
    %v123 = vunpack.c.l.b16 %v81
    %v124 = vunpack.c.h.b16 %v81
    %v125 = vunpack.c.l.b16 %v82
    %v126 = vunpack.c.h.b16 %v82
    %v127 = vunpack.c.l.b16 %v83
    %v128 = vunpack.c.h.b16 %v83
    %v129 = vunpack.c.l.b16 %v84
    %v130 = vunpack.c.h.b16 %v84
    %v131 = vunpack.c.l.b16 %v85
    %v132 = vunpack.c.h.b16 %v85
    %v133 = vunpack.c.l.b16 %v86
    %v134 = vunpack.c.h.b16 %v86
    %v135 = vunpack.c.l.b16 %v87
    %v136 = vunpack.c.h.b16 %v87
    %v137 = vunpack.c.l.b16 %v88
    %v138 = vunpack.c.h.b16 %v88
    %v139 = vunpack.c.l.b16 %v89
    %v140 = vunpack.c.h.b16 %v89
    %v141 = vunpack.c.l.b16 %v90
    %v142 = vunpack.c.h.b16 %v90
    %v143 = vunpack.c.l.b16 %v91
    %v144 = vunpack.c.h.b16 %v91
    %v145 = vunpack.c.l.b16 %v92
    %v146 = vunpack.c.h.b16 %v92
    %v147 = vunpack.c.l.b16 %v93
    %v148 = vunpack.c.h.b16 %v93
    %v149 = vunpack.c.l.b16 %v94
    %v150 = vunpack.c.h.b16 %v94
    %v151 = vpack.c.b16 %v121, %v119
    %v152 = vpack.c.b16 %v122, %v120
    %v153 = vpack.c.b16 %v125, %v123
    %v154 = vpack.c.b16 %v126, %v124
    %v155 = vpack.c.b16 %v129, %v127
    %v156 = vpack.c.b16 %v130, %v128
    %v157 = vpack.c.b16 %v133, %v131
    %v158 = vpack.c.b16 %v134, %v132
    %v159 = vpack.c.b16 %v137, %v135
    %v160 = vpack.c.b16 %v138, %v136
    %v161 = vpack.c.b16 %v141, %v139
    %v162 = vpack.c.b16 %v142, %v140
    %v163 = vpack.c.b16 %v145, %v143
    %v164 = vpack.c.b16 %v146, %v144
    %v165 = vpack.c.b16 %v149, %v147
    %v166 = vpack.c.b16 %v150, %v148
    %183 = vmatprep.subr.bf16.mxu0 %v152
    %184 = vmatpush1.bf16.msra.mxu0 %v151
    %185 = vmatprep.subr.bf16.mxu0 %v154
    %186 = vmatpush1.bf16.msra.mxu0 %v153
    %187 = vmatprep.subr.bf16.mxu0 %v156
    %188 = vmatpush1.bf16.msra.mxu0 %v155
    %189 = vmatprep.subr.bf16.mxu0 %v158
    %190 = vmatpush1.bf16.msra.mxu0 %v157
    %191 = vmatprep.subr.bf16.mxu0 %v160
    %192 = vmatpush1.bf16.msra.mxu0 %v159
    %193 = vmatprep.subr.bf16.mxu0 %v162
    %194 = vmatpush1.bf16.msra.mxu0 %v161
    %195 = vmatprep.subr.bf16.mxu0 %v164
    %196 = vmatpush1.bf16.msra.mxu0 %v163
    %197 = vmatprep.subr.bf16.mxu0 %v166
    %198 = vmatpush1.bf16.msra.mxu0 %v165
    %199 = vmatprep.subr.bf16.mxu0 0
    %200 = vmatpush1.bf16.msra.mxu0 0
    %201 = vmatprep.subr.bf16.mxu0 0
    %202 = vmatpush1.bf16.msra.mxu0 0
    %203 = vmatprep.subr.bf16.mxu0 0
    %204 = vmatpush1.bf16.msra.mxu0 0
    %205 = vmatprep.subr.bf16.mxu0 0
    %206 = vmatpush1.bf16.msra.mxu0 0
    %207 = vmatprep.subr.bf16.mxu0 0
    %208 = vmatpush1.bf16.msra.mxu0 0
    %209 = vmatprep.subr.bf16.mxu0 0
    %210 = vmatpush1.bf16.msra.mxu0 0
    %211 = vmatprep.subr.bf16.mxu0 0
    %212 = vmatpush1.bf16.msra.mxu0 0
    %213 = vmatprep.subr.bf16.mxu0 0
    %214 = vmatpush1.bf16.msra.mxu0 0
    %215 = vmatprep.mubr.bf16.mxu0 0
    %216 = vmatmul.mubr.bf16.gmra.mrb[0].mxu0 %v101
    %v217 = vpop.f32.mrb[0].mxu0
    %v218 = vadd.f32 0.0, %v217
    %v219 = vpop.f32.mrb[0].mxu0
    %v220 = vadd.f32 0.0, %v219
    %v221 = vpop.f32.mrb[0].mxu0
    %v222 = vpop.f32.mrb[0].mxu0
    %223 = vdwg.mxu0
    %v226 = vcombine.low %v218, %v220
    %v228 = vunpack.c.l.s4 1983009808
    %v229 = vunpack.c.0.s8 %v228
    %v230 = vlaneseq
    %v231 = vshrl.u32 %v230, 7
    %v232 = vsub.s32 %v229, %v231
    %v233 = vrot.slane %v226, %v232
    %235 = vst [vmem:[#allocation2] sm:$0xf] %v233
    // Predicated region
    $region14: #{prompt_encoder_forward.9} parent=1 // pred_check
      _
    $region15: #{prompt_encoder_forward.9} parent=1 // pred_check_branch
      %237 = sbr.rel (0) target = $region17
    $region16: #{prompt_encoder_forward.9} parent=1 // pred_region
      %s239 = ssub.s32 64, 64
      %240 = vsyncadd [#allocation3], %s239
      %s242 = sshll.u32 [#allocation2], 4
      %s243 = int_to_ptr.vmem [resolvable:$true] %s242
      %245 = dma.vmem_to_hbm [thread:$0]  %s243, 64, %s3, [#allocation3]
    $region17: #{prompt_encoder_forward.9} parent=1 // pred_fallthru
      _
    // Predicated region
    $region18: #{prompt_encoder_forward.9} parent=1 // pred_check
      _
    $region19: #{prompt_encoder_forward.9} parent=1 // pred_check_branch
      %247 = sbr.rel (0) target = $region21
    $region20: #{prompt_encoder_forward.9} parent=1 // pred_region
      %248 = dma.done [#allocation3], 64
    $region21: #{prompt_encoder_forward.9} parent=1 // pred_fallthru
      _
    %249 = vsyncpa [#allocation3], 1

// kernel: prompt_encoder_forward.5
$region0: #{prompt_encoder_forward.5}
  #allocation0 [shape = 'u32[]', space=smem, size = 0x4, offset = 0x4, fixed_abs, tag = 'smem constant byte address 0x4 - core index']
  #allocation1 [shape = 'u32[144,128]{1,0:T(1,128)}', space=vmem, size = 0x12000, scoped, tag = 'internal scratch']
  %s0 = inlined_call_operand.vmem [shape: f32[2,16,128], index: 0, kind: input, shape index: {}]
  %s1 = inlined_call_operand.vmem [shape: f32[1,128], index: 1, kind: input, shape index: {}]
  %s2 = inlined_call_operand.vmem [shape: bf16[128,384], index: 2, kind: input, shape index: {}]
  %s3 = inlined_call_operand.vmem [shape: bf16[128,128], index: 3, kind: input, shape index: {}]
  %s4 = inlined_call_operand.vmem [shape: f32[2,4,16,16], index: 4, kind: input, shape index: {}]
  %s5 = inlined_call_operand.vmem [shape: f32[2,16,128], index: 5, kind: output, shape index: {}]
  %s6 = sld [smem:[#allocation0]]
  $region53: #{prompt_encoder_forward.5} parent=0
    _
  %s8 = ssub.s32 1, %s6
  %s9 = scalar_select 0, %s8, %s6
  loop: start=0, step=1, limit=4
  $region2: #{prompt_encoder_forward.5} parent=0 // loop_pre_header
    _
  $region3: #{prompt_encoder_forward.5} parent=0 // loop_header
    %s11 = sphi 0, %s15
    %p12 = scmp.ge.s32.totalorder %s11, 4
    %s21 = sphi 0, %s23
    %s24 = sphi 0, %s21
    %s25 = sphi 0, %s24
    %s41 = sphi 0, %s25
    %s45 = sphi 0, %s45
    %s47 = sphi 0, %s45
    %s48 = sphi 0, %s47
    %s62 = sphi 0, %s48
    %s66 = sphi 0, %s66
    %s68 = sphi 0, %s66
    %s69 = sphi 0, %s68
    %s83 = sphi 0, %s69
    %s87 = sphi 0, %s87
    %s89 = sphi 0, %s87
    %s90 = sphi 0, %s89
    %s104 = sphi 0, %s90
    %s110 = sphi 0, %s112
    %s113 = sphi 0, %s110
    %s114 = sphi 0, %s113
    %s130 = sphi 0, %s114
    %s136 = sphi 0, %s138
    %s139 = sphi 0, %s136
    %s140 = sphi 0, %s139
    %s156 = sphi 0, %s140
  $region4: #{prompt_encoder_forward.5} parent=0 // loop_header_branch
    %14 = sbr.rel (%p12) target = $region8
  $region5: #{prompt_encoder_forward.5} parent=0 // loop_body
    %s16 = ssub.s32 %s11, 1
    %s17 = ssub.s32 %s11, 2
    %s18 = sadd.s32 %s11, 1
    %s19 = ssub.s32 %s11, %s18
    %p20 = scmp.eq.s32.totalorder %s19, 0
    %s22 = sadd.s32 %s21, 1
    %s23 = scalar_select %p20, %s21, %s22
    %p26 = pneg %p20
    %p27 = scmp.eq.s32.totalorder %s11, 1
    %p28 = por %p26, %p27
    %p29 = scmp.ne.s32.totalorder %s21, %s24
    %p30 = scmp.eq.s32.totalorder %s11, 0
    %p31 = por %p29, %p30
    %p32 = scmp.ne.s32.totalorder %s21, %s24
    %p33 = scmp.eq.s32.totalorder %s16, 1
    %p34 = por %p32, %p33
    %p35 = scmp.ne.s32.totalorder %s24, %s25
    %p36 = scmp.eq.s32.totalorder %s16, 0
    %p37 = por %p35, %p36
    %p38 = scmp.ne.s32.totalorder %s24, %s25
    %p39 = scmp.eq.s32.totalorder %s17, 1
    %p40 = por %p38, %p39
    %p42 = scmp.ne.s32.totalorder %s25, %s41
    %p43 = scmp.eq.s32.totalorder %s17, 0
    %p44 = por %p42, %p43
    %s46 = sadd.s32 %s45, 1
    %p49 = scmp.eq.s32.totalorder %s11, 1
    %p50 = scmp.ne.s32.totalorder %s45, %s47
    %p51 = scmp.eq.s32.totalorder %s11, 0
    %p52 = por %p50, %p51
    %p53 = scmp.ne.s32.totalorder %s45, %s47
    %p54 = scmp.eq.s32.totalorder %s16, 1
    %p55 = por %p53, %p54
    %p56 = scmp.ne.s32.totalorder %s47, %s48
    %p57 = scmp.eq.s32.totalorder %s16, 0
    %p58 = por %p56, %p57
    %p59 = scmp.ne.s32.totalorder %s47, %s48
    %p60 = scmp.eq.s32.totalorder %s17, 1
    %p61 = por %p59, %p60
    %p63 = scmp.ne.s32.totalorder %s48, %s62
    %p64 = scmp.eq.s32.totalorder %s17, 0
    %p65 = por %p63, %p64
    %s67 = sadd.s32 %s66, 1
    %p70 = scmp.eq.s32.totalorder %s11, 1
    %p71 = scmp.ne.s32.totalorder %s66, %s68
    %p72 = scmp.eq.s32.totalorder %s11, 0
    %p73 = por %p71, %p72
    %p74 = scmp.ne.s32.totalorder %s66, %s68
    %p75 = scmp.eq.s32.totalorder %s16, 1
    %p76 = por %p74, %p75
    %p77 = scmp.ne.s32.totalorder %s68, %s69
    %p78 = scmp.eq.s32.totalorder %s16, 0
    %p79 = por %p77, %p78
    %p80 = scmp.ne.s32.totalorder %s68, %s69
    %p81 = scmp.eq.s32.totalorder %s17, 1
    %p82 = por %p80, %p81
    %p84 = scmp.ne.s32.totalorder %s69, %s83
    %p85 = scmp.eq.s32.totalorder %s17, 0
    %p86 = por %p84, %p85
    %s88 = sadd.s32 %s87, 1
    %p91 = scmp.eq.s32.totalorder %s11, 1
    %p92 = scmp.ne.s32.totalorder %s87, %s89
    %p93 = scmp.eq.s32.totalorder %s11, 0
    %p94 = por %p92, %p93
    %p95 = scmp.ne.s32.totalorder %s87, %s89
    %p96 = scmp.eq.s32.totalorder %s16, 1
    %p97 = por %p95, %p96
    %p98 = scmp.ne.s32.totalorder %s89, %s90
    %p99 = scmp.eq.s32.totalorder %s16, 0
    %p100 = por %p98, %p99
    %p101 = scmp.ne.s32.totalorder %s89, %s90
    %p102 = scmp.eq.s32.totalorder %s17, 1
    %p103 = por %p101, %p102
    %p105 = scmp.ne.s32.totalorder %s90, %s104
    %p106 = scmp.eq.s32.totalorder %s17, 0
    %p107 = por %p105, %p106
    %s108 = ssub.s32 %s11, %s18
    %p109 = scmp.eq.s32.totalorder %s108, 0
    %s111 = sadd.s32 %s110, 1
    %s112 = scalar_select %p109, %s110, %s111
    %p115 = pneg %p109
    %p116 = scmp.eq.s32.totalorder %s11, 1
    %p117 = por %p115, %p116
    %p118 = scmp.ne.s32.totalorder %s110, %s113
    %p119 = scmp.eq.s32.totalorder %s11, 0
    %p120 = por %p118, %p119
    %p121 = scmp.ne.s32.totalorder %s110, %s113
    %p122 = scmp.eq.s32.totalorder %s16, 1
    %p123 = por %p121, %p122
    %p124 = scmp.ne.s32.totalorder %s113, %s114
    %p125 = scmp.eq.s32.totalorder %s16, 0
    %p126 = por %p124, %p125
    %p127 = scmp.ne.s32.totalorder %s113, %s114
    %p128 = scmp.eq.s32.totalorder %s17, 1
    %p129 = por %p127, %p128
    %p131 = scmp.ne.s32.totalorder %s114, %s130
    %p132 = scmp.eq.s32.totalorder %s17, 0
    %p133 = por %p131, %p132
    %s134 = ssub.s32 %s11, %s18
    %p135 = scmp.eq.s32.totalorder %s134, 0
    %s137 = sadd.s32 %s136, 1
    %s138 = scalar_select %p135, %s136, %s137
    %p141 = pneg %p135
    %p142 = scmp.eq.s32.totalorder %s11, 1
    %p143 = por %p141, %p142
    %p144 = scmp.ne.s32.totalorder %s136, %s139
    %p145 = scmp.eq.s32.totalorder %s11, 0
    %p146 = por %p144, %p145
    %p147 = scmp.ne.s32.totalorder %s136, %s139
    %p148 = scmp.eq.s32.totalorder %s16, 1
    %p149 = por %p147, %p148
    %p150 = scmp.ne.s32.totalorder %s139, %s140
    %p151 = scmp.eq.s32.totalorder %s16, 0
    %p152 = por %p150, %p151
    %p153 = scmp.ne.s32.totalorder %s139, %s140
    %p154 = scmp.eq.s32.totalorder %s17, 1
    %p155 = por %p153, %p154
    %p157 = scmp.ne.s32.totalorder %s140, %s156
    %p158 = scmp.eq.s32.totalorder %s17, 0
    %p159 = por %p157, %p158
    %p160 = scmp.le.s32.totalorder 1, %s11
    %p161 = scmp.lt.s32.totalorder %s11, 3
    %p162 = pnand %p160, %p161
    %p163 = pneg %p162
    // Predicated region
    $region9: #{prompt_encoder_forward.5} parent=5 // pred_check
      _
    $region10: #{prompt_encoder_forward.5} parent=5 // pred_check_branch
      %165 = sbr.rel (%p162) target = $region12
    $region11: #{prompt_encoder_forward.5} parent=5 // pred_region
      %s166 = ssub.s32 %s11, 1
      // Predicated region
      $region13: #{prompt_encoder_forward.5} parent=11 // pred_check
        %p167 = pneg %p58
      $region14: #{prompt_encoder_forward.5} parent=11 // pred_check_branch
        %169 = sbr.rel (%p167) target = $region16
      $region15: #{prompt_encoder_forward.5} parent=11 // pred_region
        _
      $region16: #{prompt_encoder_forward.5} parent=11 // pred_fallthru
        _
      // Predicated region
      $region17: #{prompt_encoder_forward.5} parent=11 // pred_check
        %p170 = pneg %p79
      $region18: #{prompt_encoder_forward.5} parent=11 // pred_check_branch
        %172 = sbr.rel (%p170) target = $region20
      $region19: #{prompt_encoder_forward.5} parent=11 // pred_region
        _
      $region20: #{prompt_encoder_forward.5} parent=11 // pred_fallthru
        _
      // Predicated region
      $region21: #{prompt_encoder_forward.5} parent=11 // pred_check
        %p173 = pneg %p100
      $region22: #{prompt_encoder_forward.5} parent=11 // pred_check_branch
        %175 = sbr.rel (%p173) target = $region24
      $region23: #{prompt_encoder_forward.5} parent=11 // pred_region
        _
      $region24: #{prompt_encoder_forward.5} parent=11 // pred_fallthru
        _
    $region12: #{prompt_encoder_forward.5} parent=5 // pred_fallthru
      _
    %p176 = scmp.lt.s32.totalorder %s11, 2
    // Predicated region
    $region25: #{prompt_encoder_forward.5} parent=5 // pred_check
      %p177 = pneg %p176
    $region26: #{prompt_encoder_forward.5} parent=5 // pred_check_branch
      %179 = sbr.rel (%p177) target = $region28
    $region27: #{prompt_encoder_forward.5} parent=5 // pred_region
      // Predicated region
      $region29: #{prompt_encoder_forward.5} parent=27 // pred_check
        %p180 = pneg %p31
      $region30: #{prompt_encoder_forward.5} parent=27 // pred_check_branch
        %182 = sbr.rel (%p180) target = $region32
      $region31: #{prompt_encoder_forward.5} parent=27 // pred_region
        %p183 = scmp.lt.s32.totalorder %s11, 1
        %s184 = scalar_select %p183, %s11, 1
        %s185 = smul.addr %s184, 2
        %s186 = smul.addr %s185, 8
        %s187 = scalar_lea.vmem %s0, %s186
      $region32: #{prompt_encoder_forward.5} parent=27 // pred_fallthru
        _
      // Predicated region
      $region33: #{prompt_encoder_forward.5} parent=27 // pred_check
        %p188 = pneg %p120
      $region34: #{prompt_encoder_forward.5} parent=27 // pred_check_branch
        %190 = sbr.rel (%p188) target = $region36
      $region35: #{prompt_encoder_forward.5} parent=27 // pred_region
        %p191 = scmp.lt.s32.totalorder %s11, 1
        %s192 = scalar_select %p191, %s11, 1
        %s193 = smul.addr %s192, 8
        %s194 = smul.addr %s193, 8
        %s195 = scalar_lea.vmem %s4, %s194
      $region36: #{prompt_encoder_forward.5} parent=27 // pred_fallthru
        _
    $region28: #{prompt_encoder_forward.5} parent=5 // pred_fallthru
      _
    %p196 = scmp.le.s32.totalorder 1, %s11
    %p197 = scmp.lt.s32.totalorder %s11, 3
    %p198 = pnand %p196, %p197
    %p199 = pneg %p198
    // Predicated region
    $region37: #{prompt_encoder_forward.5} parent=5 // pred_check
      _
    $region38: #{prompt_encoder_forward.5} parent=5 // pred_check_branch
      %201 = sbr.rel (%p198) target = $region40
    $region39: #{prompt_encoder_forward.5} parent=5 // pred_region
      %s202 = ssub.s32 %s11, 1
      %p203 = scmp.lt.s32.totalorder %s16, 1
      %s204 = scalar_select %p203, %s16, 1
      %s205 = smul.addr %s204, 2
      %s206 = smul.addr %s205, 8
      %s207 = scalar_lea.vmem %s0, %s206
      %p208 = pneg %p37
      %p209 = pneg %p34
      %p210 = pneg %p58
      %p211 = pneg %p55
      %p212 = pneg %p79
      %p213 = pneg %p76
      %p214 = pneg %p100
      %p215 = pneg %p97
      %p216 = scmp.lt.s32.totalorder %s16, 1
      %s217 = scalar_select %p216, %s16, 1
      %s218 = smul.addr %s217, 8
      %s219 = smul.addr %s218, 8
      %s220 = scalar_lea.vmem %s4, %s219
      %p221 = pneg %p126
      %p222 = pneg %p123
      %p223 = pneg %p152
      %p224 = pneg %p149
      %p225 = scmp.lt.s32.totalorder %s16, 1
      %s226 = scalar_select %p225, %s16, 1
      %s227 = smul.addr %s226, 2
      %s228 = smul.addr %s227, 8
      %s229 = scalar_lea.vmem %s5, %s228
      %p230 = scmp.lt.s32.totalorder %s16, 1
      %s231 = scalar_select %p230, %s16, 1
      %s232 = smul.addr %s231, 2
      %s233 = smul.addr %s232, 8
      %s234 = scalar_lea.vmem %s0, %s233
      %p235 = scmp.lt.s32.totalorder %s16, 1
      %s236 = scalar_select %p235, %s16, 1
      %s237 = smul.addr %s236, 8
      %s238 = smul.addr %s237, 8
      %s239 = scalar_lea.vmem %s4, %s238
      %p240 = scmp.lt.s32.totalorder %s16, 1
      %s241 = scalar_select %p240, %s16, 1
      %s242 = smul.addr %s241, 2
      %s243 = smul.addr %s242, 8
      %s244 = scalar_lea.vmem %s5, %s243
      %v246 = vld [vmem:[%s234] sm:$0xff]
      %v247 = vld [vmem:[%s234 + $0x8] sm:$0xff]
      %v248 = vmul.f32 %v246, %v246
      %v249 = vmul.f32 %v247, %v247
      %250 = vadd.xlane.f32.xlu0 %v248
      %v251 = vpop.xlane.xlu0 %250
      %252 = vadd.xlane.f32.xlu0 %v249
      %v253 = vpop.xlane.xlu0 %252
      %v254 = vrcp.pop 128.0
      %v255 = vmul.f32 %v251, %v254
      %v256 = vmul.f32 %v253, %v254
      %v257 = vadd.f32 %v255, 1e-06
      %v258 = vadd.f32 %v256, 1e-06
      %v259 = vrsqrt.pop %v257
      %v260 = vrsqrt.pop %v258
      %v261 = vmul.f32 %v246, %v259
      %v262 = vmul.f32 %v247, %v260
      %v263 = vld [vmem:[%s1] sm:$0x1]
      %v265 = vlaneseq
      %v266 = vshrl.u32 %v265, 7
      %v267 = vsub.s32 0, %v266
      %v268 = vrot.slane %v263, %v267
      %v270 = vmul.f32 %v261, %v268
      %v271 = vmul.f32 %v262, %v268
      %v272 = vpack.c.bf16 %v271, %v270
      %v273 = vld [vmem:[%s2] sm:$0xff]
      %v274 = vld [vmem:[%s2 + $0x8] sm:$0xf]
      %v275 = vld [vmem:[%s2 + $0xc] sm:$0xff]
      %v276 = vld [vmem:[%s2 + $0x14] sm:$0xf]
      %v277 = vld [vmem:[%s2 + $0x18] sm:$0xff]
      %v278 = vld [vmem:[%s2 + $0x20] sm:$0xf]
      %v279 = vld [vmem:[%s2 + $0x24] sm:$0xff]
      %v280 = vld [vmem:[%s2 + $0x2c] sm:$0xf]
      %v281 = vld [vmem:[%s2 + $0x30] sm:$0xff]
      %v282 = vld [vmem:[%s2 + $0x38] sm:$0xf]
      %v283 = vld [vmem:[%s2 + $0x3c] sm:$0xff]
      %v284 = vld [vmem:[%s2 + $0x44] sm:$0xf]
      %v285 = vld [vmem:[%s2 + $0x48] sm:$0xff]
      %v286 = vld [vmem:[%s2 + $0x50] sm:$0xf]
      %v287 = vld [vmem:[%s2 + $0x54] sm:$0xff]
      %v288 = vld [vmem:[%s2 + $0x5c] sm:$0xf]
      %v289 = vld [vmem:[%s2 + $0x60] sm:$0xff]
      %v290 = vld [vmem:[%s2 + $0x68] sm:$0xf]
      %v291 = vld [vmem:[%s2 + $0x6c] sm:$0xff]
      %v292 = vld [vmem:[%s2 + $0x74] sm:$0xf]
      %v293 = vld [vmem:[%s2 + $0x78] sm:$0xff]
      %v294 = vld [vmem:[%s2 + $0x80] sm:$0xf]
      %v295 = vld [vmem:[%s2 + $0x84] sm:$0xff]
      %v296 = vld [vmem:[%s2 + $0x8c] sm:$0xf]
      %v297 = vld [vmem:[%s2 + $0x90] sm:$0xff]
      %v298 = vld [vmem:[%s2 + $0x98] sm:$0xf]
      %v299 = vld [vmem:[%s2 + $0x9c] sm:$0xff]
      %v300 = vld [vmem:[%s2 + $0xa4] sm:$0xf]
      %v301 = vld [vmem:[%s2 + $0xa8] sm:$0xff]
      %v302 = vld [vmem:[%s2 + $0xb0] sm:$0xf]
      %v303 = vld [vmem:[%s2 + $0xb4] sm:$0xff]
      %v304 = vld [vmem:[%s2 + $0xbc] sm:$0xf]
      %v337 = vunpack.c.l.b16 %v273
      %v338 = vunpack.c.h.b16 %v273
      %v339 = vunpack.c.l.b16 %v274
      %v340 = vunpack.c.l.b16 %v275
      %v341 = vunpack.c.h.b16 %v275
      %v342 = vunpack.c.l.b16 %v276
      %v343 = vunpack.c.l.b16 %v277
      %v344 = vunpack.c.h.b16 %v277
      %v345 = vunpack.c.l.b16 %v278
      %v346 = vunpack.c.l.b16 %v279
      %v347 = vunpack.c.h.b16 %v279
      %v348 = vunpack.c.l.b16 %v280
      %v349 = vunpack.c.l.b16 %v281
      %v350 = vunpack.c.h.b16 %v281
      %v351 = vunpack.c.l.b16 %v282
      %v352 = vunpack.c.l.b16 %v283
      %v353 = vunpack.c.h.b16 %v283
      %v354 = vunpack.c.l.b16 %v284
      %v355 = vunpack.c.l.b16 %v285
      %v356 = vunpack.c.h.b16 %v285
      %v357 = vunpack.c.l.b16 %v286
      %v358 = vunpack.c.l.b16 %v287
      %v359 = vunpack.c.h.b16 %v287
      %v360 = vunpack.c.l.b16 %v288
      %v361 = vunpack.c.l.b16 %v289
      %v362 = vunpack.c.h.b16 %v289
      %v363 = vunpack.c.l.b16 %v290
      %v364 = vunpack.c.l.b16 %v291
      %v365 = vunpack.c.h.b16 %v291
      %v366 = vunpack.c.l.b16 %v292
      %v367 = vunpack.c.l.b16 %v293
      %v368 = vunpack.c.h.b16 %v293
      %v369 = vunpack.c.l.b16 %v294
      %v370 = vunpack.c.l.b16 %v295
      %v371 = vunpack.c.h.b16 %v295
      %v372 = vunpack.c.l.b16 %v296
      %v373 = vunpack.c.l.b16 %v297
      %v374 = vunpack.c.h.b16 %v297
      %v375 = vunpack.c.l.b16 %v298
      %v376 = vunpack.c.l.b16 %v299
      %v377 = vunpack.c.h.b16 %v299
      %v378 = vunpack.c.l.b16 %v300
      %v379 = vunpack.c.l.b16 %v301
      %v380 = vunpack.c.h.b16 %v301
      %v381 = vunpack.c.l.b16 %v302
      %v382 = vunpack.c.l.b16 %v303
      %v383 = vunpack.c.h.b16 %v303
      %v384 = vunpack.c.l.b16 %v304
      %v385 = vpack.c.b16 %v340, %v337
      %v386 = vpack.c.b16 %v341, %v338
      %v387 = vpack.c.b16 %v342, %v339
      %v388 = vpack.c.b16 %v346, %v343
      %v389 = vpack.c.b16 %v347, %v344
      %v390 = vpack.c.b16 %v348, %v345
      %v391 = vpack.c.b16 %v352, %v349
      %v392 = vpack.c.b16 %v353, %v350
      %v393 = vpack.c.b16 %v354, %v351
      %v394 = vpack.c.b16 %v358, %v355
      %v395 = vpack.c.b16 %v359, %v356
      %v396 = vpack.c.b16 %v360, %v357
      %v397 = vpack.c.b16 %v364, %v361
      %v398 = vpack.c.b16 %v365, %v362
      %v399 = vpack.c.b16 %v366, %v363
      %v400 = vpack.c.b16 %v370, %v367
      %v401 = vpack.c.b16 %v371, %v368
      %v402 = vpack.c.b16 %v372, %v369
      %v403 = vpack.c.b16 %v376, %v373
      %v404 = vpack.c.b16 %v377, %v374
      %v405 = vpack.c.b16 %v378, %v375
      %v406 = vpack.c.b16 %v382, %v379
      %v407 = vpack.c.b16 %v383, %v380
      %v408 = vpack.c.b16 %v384, %v381
      %433 = vmatprep.subr.bf16.mxu0 %v386
      %434 = vmatpush1.bf16.msra.mxu0 %v385
      %435 = vmatprep.subr.bf16.mxu0 %v389
      %436 = vmatpush1.bf16.msra.mxu0 %v388
      %437 = vmatprep.subr.bf16.mxu0 %v392
      %438 = vmatpush1.bf16.msra.mxu0 %v391
      %439 = vmatprep.subr.bf16.mxu0 %v395
      %440 = vmatpush1.bf16.msra.mxu0 %v394
      %441 = vmatprep.subr.bf16.mxu0 %v398
      %442 = vmatpush1.bf16.msra.mxu0 %v397
      %443 = vmatprep.subr.bf16.mxu0 %v401
      %444 = vmatpush1.bf16.msra.mxu0 %v400
      %445 = vmatprep.subr.bf16.mxu0 %v404
      %446 = vmatpush1.bf16.msra.mxu0 %v403
      %447 = vmatprep.subr.bf16.mxu0 %v407
      %448 = vmatpush1.bf16.msra.mxu0 %v406
      %449 = vmatprep.subr.bf16.mxu0 0
      %450 = vmatpush1.bf16.msra.mxu0 0
      %451 = vmatprep.subr.bf16.mxu0 0
      %452 = vmatpush1.bf16.msra.mxu0 0
      %453 = vmatprep.subr.bf16.mxu0 0
      %454 = vmatpush1.bf16.msra.mxu0 0
      %455 = vmatprep.subr.bf16.mxu0 0
      %456 = vmatpush1.bf16.msra.mxu0 0
      %457 = vmatprep.subr.bf16.mxu0 0
      %458 = vmatpush1.bf16.msra.mxu0 0
      %459 = vmatprep.subr.bf16.mxu0 0
      %460 = vmatpush1.bf16.msra.mxu0 0
      %461 = vmatprep.subr.bf16.mxu0 0
      %462 = vmatpush1.bf16.msra.mxu0 0
      %463 = vmatprep.subr.bf16.mxu0 0
      %464 = vmatpush1.bf16.msra.mxu0 0
      %465 = vmatprep.mubr.bf16.mxu0 0
      %466 = vmatmul.mubr.bf16.gmra.mrb[0].mxu0 %v272
      %v467 = vpop.f32.mrb[0].mxu0
      %v468 = vadd.f32 0.0, %v467
      %v469 = vpop.f32.mrb[0].mxu0
      %v470 = vadd.f32 0.0, %v469
      %v471 = vpop.f32.mrb[0].mxu0
      %v472 = vadd.f32 0.0, %v471
      %v473 = vpop.f32.mrb[0].mxu0
      %v474 = vadd.f32 0.0, %v473
      %475 = vdwg.mxu0
      %476 = vmatprep.subr.bf16.mxu0 0
      %477 = vmatpush1.bf16.msra.mxu0 %v387
      %478 = vmatprep.subr.bf16.mxu0 0
      %479 = vmatpush1.bf16.msra.mxu0 %v390
      %480 = vmatprep.subr.bf16.mxu0 0
      %481 = vmatpush1.bf16.msra.mxu0 %v393
      %482 = vmatprep.subr.bf16.mxu0 0
      %483 = vmatpush1.bf16.msra.mxu0 %v396
      %484 = vmatprep.subr.bf16.mxu0 0
      %485 = vmatpush1.bf16.msra.mxu0 %v399
      %486 = vmatprep.subr.bf16.mxu0 0
      %487 = vmatpush1.bf16.msra.mxu0 %v402
      %488 = vmatprep.subr.bf16.mxu0 0
      %489 = vmatpush1.bf16.msra.mxu0 %v405
      %490 = vmatprep.subr.bf16.mxu0 0
      %491 = vmatpush1.bf16.msra.mxu0 %v408
      %492 = vmatprep.subr.bf16.mxu0 0
      %493 = vmatpush1.bf16.msra.mxu0 0
      %494 = vmatprep.subr.bf16.mxu0 0
      %495 = vmatpush1.bf16.msra.mxu0 0
      %496 = vmatprep.subr.bf16.mxu0 0
      %497 = vmatpush1.bf16.msra.mxu0 0
      %498 = vmatprep.subr.bf16.mxu0 0
      %499 = vmatpush1.bf16.msra.mxu0 0
      %500 = vmatprep.subr.bf16.mxu0 0
      %501 = vmatpush1.bf16.msra.mxu0 0
      %502 = vmatprep.subr.bf16.mxu0 0
      %503 = vmatpush1.bf16.msra.mxu0 0
      %504 = vmatprep.subr.bf16.mxu0 0
      %505 = vmatpush1.bf16.msra.mxu0 0
      %506 = vmatprep.subr.bf16.mxu0 0
      %507 = vmatpush1.bf16.msra.mxu0 0
      %508 = vmatprep.mubr.bf16.mxu0 0
      %509 = vmatmul.mubr.bf16.gmra.mrb[0].mxu0 %v272
      %v510 = vpop.f32.mrb[0].mxu0
      %v511 = vadd.f32 0.0, %v510
      %v512 = vpop.f32.mrb[0].mxu0
      %v513 = vpop.f32.mrb[0].mxu0
      %v514 = vadd.f32 0.0, %v513
      %v515 = vpop.f32.mrb[0].mxu0
      %516 = vdwg.mxu0
      %v517 = vld [vmem:[%s239] sm:$0xff]
      %v518 = vld [vmem:[%s239 + $0x8] sm:$0xff]
      %vm519 = vcmask 261120
      %v521 = vsel %vm519, %v468, 0
      %v524 = vsel %vm519, %v472, 0
      %v527 = vsel %vm519, %v470, 0
      %v530 = vsel %vm519, %v474, 0
      %532 = vmatprep.subr.mxu0 0.0
      %533 = vmatpush1.xpose.msra.mxu0 %v527
      %534 = vmatprep.subr.mxu0 0.0
      %535 = vmatpush1.xpose.msra.mxu0 %v530
      %536 = vmatprep.subr.mxu0 0.0
      %537 = vmatpush1.xpose.msra.mxu0 0.0
      %538 = vmatprep.subr.mxu0 0.0
      %539 = vmatpush1.xpose.msra.mxu0 0.0
      %540 = vmatprep.subr.mxu0 0.0
      %541 = vmatpush1.xpose.msra.mxu0 0.0
      %542 = vmatprep.subr.mxu0 0.0
      %543 = vmatpush1.xpose.msra.mxu0 0.0
      %544 = vmatprep.subr.mxu0 0.0
      %545 = vmatpush1.xpose.msra.mxu0 0.0
      %546 = vmatprep.subr.mxu0 0.0
      %547 = vmatpush1.xpose.msra.mxu0 0.0
      %548 = vmatprep.subr.mxu0 0.0
      %549 = vmatpush1.xpose.msra.mxu0 0.0
      %550 = vmatprep.subr.mxu0 0.0
      %551 = vmatpush1.xpose.msra.mxu0 0.0
      %552 = vmatprep.subr.mxu0 0.0
      %553 = vmatpush1.xpose.msra.mxu0 0.0
      %554 = vmatprep.subr.mxu0 0.0
      %555 = vmatpush1.xpose.msra.mxu0 0.0
      %556 = vmatprep.subr.mxu0 0.0
      %557 = vmatpush1.xpose.msra.mxu0 0.0
      %558 = vmatprep.subr.mxu0 0.0
      %559 = vmatpush1.xpose.msra.mxu0 0.0
      %560 = vmatprep.subr.mxu0 0.0
      %561 = vmatpush1.xpose.msra.mxu0 0.0
      %562 = vmatprep.subr.mxu0 0.0
      %563 = vmatpush1.xpose.msra.mxu0 0.0
      %564 = vmatprep.subr.mxu0 0.0
      %565 = vmatpush1.xpose.msra.mxu0 0.0
      %566 = vmatprep.subr.mxu0 0.0
      %567 = vmatpush1.xpose.msra.mxu0 0.0
      %568 = vmatprep.subr.mxu0 0.0
      %569 = vmatpush1.xpose.msra.mxu0 0.0
      %570 = vmatprep.subr.mxu0 0.0
      %571 = vmatpush1.xpose.msra.mxu0 0.0
      %572 = vmatprep.subr.mxu0 0.0
      %573 = vmatpush1.xpose.msra.mxu0 0.0
      %574 = vmatprep.subr.mxu0 0.0
      %575 = vmatpush1.xpose.msra.mxu0 0.0
      %576 = vmatprep.subr.mxu0 0.0
      %577 = vmatpush1.xpose.msra.mxu0 0.0
      %578 = vmatprep.subr.mxu0 0.0
      %579 = vmatpush1.xpose.msra.mxu0 0.0
      %580 = vmatprep.subr.mxu0 0.0
      %581 = vmatpush1.xpose.msra.mxu0 0.0
      %582 = vmatprep.subr.mxu0 0.0
      %583 = vmatpush1.xpose.msra.mxu0 0.0
      %584 = vmatprep.subr.mxu0 0.0
      %585 = vmatpush1.xpose.msra.mxu0 0.0
      %586 = vmatprep.subr.mxu0 0.0
      %587 = vmatpush1.xpose.msra.mxu0 0.0
      %588 = vmatprep.subr.mxu0 0.0
      %589 = vmatpush1.xpose.msra.mxu0 0.0
      %590 = vmatprep.subr.mxu0 0.0
      %591 = vmatpush1.xpose.msra.mxu0 0.0
      %592 = vmatprep.subr.mxu0 0.0
      %593 = vmatpush1.xpose.msra.mxu0 0.0
      %594 = vmatprep.subr.mxu0 0.0
      %595 = vmatpush1.xpose.msra.mxu0 0.0
      %596 = vmatprep.mubr.f32.mxu0 0.0
      %597 = vmatmul.mubr.f32.gmra.mrb[0].mxu0 %v521
      %v598 = vpop.f32.mrb[0].mxu0
      %v599 = vadd.f32 %v517, %v598
      %v600 = vpop.f32.mrb[0].mxu0
      %601 = vmatprep.mubr.f32.mxu0 0.0
      %602 = vmatmul.mubr.f32.gmra.mrb[0].mxu0 %v524
      %v603 = vpop.f32.mrb[0].mxu0
      %v604 = vadd.f32 %v518, %v603
      %v605 = vpop.f32.mrb[0].mxu0
      %606 = vdwg.mxu0
      %vm607 = vcmask 130048
      %v608 = vsel %vm607, %v599, -inf
      %609 = vmax.xlane.f32.xlu0 %v608
      %v610 = vpop.xlane.xlu0 %609
      %v611 = vsel %vm607, %v604, -inf
      %612 = vmax.xlane.f32.xlu0 %v611
      %v613 = vpop.xlane.xlu0 %612
      %v614 = vsub.f32 %v599, %v610
      %v615 = vsub.f32 %v604, %v613
      %v616 = vmul.f32 %v614, 1.442695
      %v617 = vpow.pop %v616
      %v618 = vmul.f32 %v615, 1.442695
      %v619 = vpow.pop %v618
      %v620 = vsel %vm607, %v617, 0.0
      %621 = vadd.xlane.f32.xlu0 %v620
      %v622 = vpop.xlane.xlu0 %621
      %v623 = vsel %vm607, %v619, 0.0
      %624 = vadd.xlane.f32.xlu0 %v623
      %v625 = vpop.xlane.xlu0 %624
      %v626 = vrcp.pop %v622
      %v627 = vrcp.pop %v625
      %v628 = vmul.f32 %v617, %v626
      %v629 = vmul.f32 %v619, %v627
      %v630 = vpack.c.bf16 %v629, %v628
      %v631 = vpack.c.bf16 %v514, %v511
      %v633 = vsel %vm607, %v630, 0
      %635 = vmatprep.subr.bf16.mxu0 0
      %636 = vmatpush1.bf16.msra.mxu0 %v631
      %637 = vmatprep.subr.bf16.mxu0 0
      %638 = vmatpush1.bf16.msra.mxu0 0
      %639 = vmatprep.subr.bf16.mxu0 0
      %640 = vmatpush1.bf16.msra.mxu0 0
      %641 = vmatprep.subr.bf16.mxu0 0
      %642 = vmatpush1.bf16.msra.mxu0 0
      %643 = vmatprep.subr.bf16.mxu0 0
      %644 = vmatpush1.bf16.msra.mxu0 0
      %645 = vmatprep.subr.bf16.mxu0 0
      %646 = vmatpush1.bf16.msra.mxu0 0
      %647 = vmatprep.subr.bf16.mxu0 0
      %648 = vmatpush1.bf16.msra.mxu0 0
      %649 = vmatprep.subr.bf16.mxu0 0
      %650 = vmatpush1.bf16.msra.mxu0 0
      %651 = vmatprep.subr.bf16.mxu0 0
      %652 = vmatpush1.bf16.msra.mxu0 0
      %653 = vmatprep.subr.bf16.mxu0 0
      %654 = vmatpush1.bf16.msra.mxu0 0
      %655 = vmatprep.subr.bf16.mxu0 0
      %656 = vmatpush1.bf16.msra.mxu0 0
      %657 = vmatprep.subr.bf16.mxu0 0
      %658 = vmatpush1.bf16.msra.mxu0 0
      %659 = vmatprep.subr.bf16.mxu0 0
      %660 = vmatpush1.bf16.msra.mxu0 0
      %661 = vmatprep.subr.bf16.mxu0 0
      %662 = vmatpush1.bf16.msra.mxu0 0
      %663 = vmatprep.subr.bf16.mxu0 0
      %664 = vmatpush1.bf16.msra.mxu0 0
      %665 = vmatprep.subr.bf16.mxu0 0
      %666 = vmatpush1.bf16.msra.mxu0 0
      %667 = vmatprep.mubr.bf16.mxu0 0
      %668 = vmatmul.mubr.bf16.gmra.mrb[0].mxu0 %v633
      %v669 = vpop.f32.mrb[0].mxu0
      %v670 = vadd.f32 0.0, %v669
      %v671 = vpop.f32.mrb[0].mxu0
      %v672 = vpop.f32.mrb[0].mxu0
      %v673 = vadd.f32 0.0, %v672
      %v674 = vpop.f32.mrb[0].mxu0
      %675 = vdwg.mxu0
      %s676 = scalar_lea.vmem %s239, 16
      %v677 = vld [vmem:[%s676] sm:$0xff]
      %v678 = vld [vmem:[%s676 + $0x8] sm:$0xff]
      %679 = vrot.lane.b32.xlu0 %v468, 96
      %v680 = vpop.permute.xlu0 %679
      %681 = vrot.lane.b32.xlu0 %v472, 96
      %v682 = vpop.permute.xlu0 %681
      %683 = vrot.lane.b32.xlu0 %v470, 96
      %v684 = vpop.permute.xlu0 %683
      %685 = vrot.lane.b32.xlu0 %v474, 96
      %v686 = vpop.permute.xlu0 %685
      %v687 = vsel %vm519, %v680, 0
      %v689 = vsel %vm519, %v682, 0
      %v691 = vsel %vm519, %v684, 0
      %v693 = vsel %vm519, %v686, 0
      %695 = vmatprep.subr.mxu0 0.0
      %696 = vmatpush1.xpose.msra.mxu0 %v691
      %697 = vmatprep.subr.mxu0 0.0
      %698 = vmatpush1.xpose.msra.mxu0 %v693
      %699 = vmatprep.subr.mxu0 0.0
      %700 = vmatpush1.xpose.msra.mxu0 0.0
      %701 = vmatprep.subr.mxu0 0.0
      %702 = vmatpush1.xpose.msra.mxu0 0.0
      %703 = vmatprep.subr.mxu0 0.0
      %704 = vmatpush1.xpose.msra.mxu0 0.0
      %705 = vmatprep.subr.mxu0 0.0
      %706 = vmatpush1.xpose.msra.mxu0 0.0
      %707 = vmatprep.subr.mxu0 0.0
      %708 = vmatpush1.xpose.msra.mxu0 0.0
      %709 = vmatprep.subr.mxu0 0.0
      %710 = vmatpush1.xpose.msra.mxu0 0.0
      %711 = vmatprep.subr.mxu0 0.0
      %712 = vmatpush1.xpose.msra.mxu0 0.0
      %713 = vmatprep.subr.mxu0 0.0
      %714 = vmatpush1.xpose.msra.mxu0 0.0
      %715 = vmatprep.subr.mxu0 0.0
      %716 = vmatpush1.xpose.msra.mxu0 0.0
      %717 = vmatprep.subr.mxu0 0.0
      %718 = vmatpush1.xpose.msra.mxu0 0.0
      %719 = vmatprep.subr.mxu0 0.0
      %720 = vmatpush1.xpose.msra.mxu0 0.0
      %721 = vmatprep.subr.mxu0 0.0
      %722 = vmatpush1.xpose.msra.mxu0 0.0
      %723 = vmatprep.subr.mxu0 0.0
      %724 = vmatpush1.xpose.msra.mxu0 0.0
      %725 = vmatprep.subr.mxu0 0.0
      %726 = vmatpush1.xpose.msra.mxu0 0.0
      %727 = vmatprep.subr.mxu0 0.0
      %728 = vmatpush1.xpose.msra.mxu0 0.0
      %729 = vmatprep.subr.mxu0 0.0
      %730 = vmatpush1.xpose.msra.mxu0 0.0
      %731 = vmatprep.subr.mxu0 0.0
      %732 = vmatpush1.xpose.msra.mxu0 0.0
      %733 = vmatprep.subr.mxu0 0.0
      %734 = vmatpush1.xpose.msra.mxu0 0.0
      %735 = vmatprep.subr.mxu0 0.0
      %736 = vmatpush1.xpose.msra.mxu0 0.0
      %737 = vmatprep.subr.mxu0 0.0
      %738 = vmatpush1.xpose.msra.mxu0 0.0
      %739 = vmatprep.subr.mxu0 0.0
      %740 = vmatpush1.xpose.msra.mxu0 0.0
      %741 = vmatprep.subr.mxu0 0.0
      %742 = vmatpush1.xpose.msra.mxu0 0.0
      %743 = vmatprep.subr.mxu0 0.0
      %744 = vmatpush1.xpose.msra.mxu0 0.0
      %745 = vmatprep.subr.mxu0 0.0
      %746 = vmatpush1.xpose.msra.mxu0 0.0
      %747 = vmatprep.subr.mxu0 0.0
      %748 = vmatpush1.xpose.msra.mxu0 0.0
      %749 = vmatprep.subr.mxu0 0.0
      %750 = vmatpush1.xpose.msra.mxu0 0.0
      %751 = vmatprep.subr.mxu0 0.0
      %752 = vmatpush1.xpose.msra.mxu0 0.0
      %753 = vmatprep.subr.mxu0 0.0
      %754 = vmatpush1.xpose.msra.mxu0 0.0
      %755 = vmatprep.subr.mxu0 0.0
      %756 = vmatpush1.xpose.msra.mxu0 0.0
      %757 = vmatprep.subr.mxu0 0.0
      %758 = vmatpush1.xpose.msra.mxu0 0.0
      %759 = vmatprep.mubr.f32.mxu0 0.0
      %760 = vmatmul.mubr.f32.gmra.mrb[0].mxu0 %v687
      %v761 = vpop.f32.mrb[0].mxu0
      %v762 = vadd.f32 %v677, %v761
      %v763 = vpop.f32.mrb[0].mxu0
      %764 = vmatprep.mubr.f32.mxu0 0.0
      %765 = vmatmul.mubr.f32.gmra.mrb[0].mxu0 %v689
      %v766 = vpop.f32.mrb[0].mxu0
      %v767 = vadd.f32 %v678, %v766
      %v768 = vpop.f32.mrb[0].mxu0
      %769 = vdwg.mxu0
      %v770 = vsel %vm607, %v762, -inf
      %771 = vmax.xlane.f32.xlu0 %v770
      %v772 = vpop.xlane.xlu0 %771
      %v773 = vsel %vm607, %v767, -inf
      %774 = vmax.xlane.f32.xlu0 %v773
      %v775 = vpop.xlane.xlu0 %774
      %v776 = vsub.f32 %v762, %v772
      %v777 = vsub.f32 %v767, %v775
      %v778 = vmul.f32 %v776, 1.442695
      %v779 = vpow.pop %v778
      %v780 = vmul.f32 %v777, 1.442695
      %v781 = vpow.pop %v780
      %v782 = vsel %vm607, %v779, 0.0
      %783 = vadd.xlane.f32.xlu0 %v782
      %v784 = vpop.xlane.xlu0 %783
      %v785 = vsel %vm607, %v781, 0.0
      %786 = vadd.xlane.f32.xlu0 %v785
      %v787 = vpop.xlane.xlu0 %786
      %v788 = vrcp.pop %v784
      %v789 = vrcp.pop %v787
      %v790 = vmul.f32 %v779, %v788
      %v791 = vmul.f32 %v781, %v789
      %v792 = vpack.c.bf16 %v791, %v790
      %794 = vrot.lane.b32.xlu0 %v631, 96
      %v795 = vpop.permute.xlu0 %794
      %v798 = vsel %vm607, %v792, 0
      %800 = vmatprep.subr.bf16.mxu0 0
      %801 = vmatpush1.bf16.msra.mxu0 %v795
      %802 = vmatprep.subr.bf16.mxu0 0
      %803 = vmatpush1.bf16.msra.mxu0 0
      %804 = vmatprep.subr.bf16.mxu0 0
      %805 = vmatpush1.bf16.msra.mxu0 0
      %806 = vmatprep.subr.bf16.mxu0 0
      %807 = vmatpush1.bf16.msra.mxu0 0
      %808 = vmatprep.subr.bf16.mxu0 0
      %809 = vmatpush1.bf16.msra.mxu0 0
      %810 = vmatprep.subr.bf16.mxu0 0
      %811 = vmatpush1.bf16.msra.mxu0 0
      %812 = vmatprep.subr.bf16.mxu0 0
      %813 = vmatpush1.bf16.msra.mxu0 0
      %814 = vmatprep.subr.bf16.mxu0 0
      %815 = vmatpush1.bf16.msra.mxu0 0
      %816 = vmatprep.subr.bf16.mxu0 0
      %817 = vmatpush1.bf16.msra.mxu0 0
      %818 = vmatprep.subr.bf16.mxu0 0
      %819 = vmatpush1.bf16.msra.mxu0 0
      %820 = vmatprep.subr.bf16.mxu0 0
      %821 = vmatpush1.bf16.msra.mxu0 0
      %822 = vmatprep.subr.bf16.mxu0 0
      %823 = vmatpush1.bf16.msra.mxu0 0
      %824 = vmatprep.subr.bf16.mxu0 0
      %825 = vmatpush1.bf16.msra.mxu0 0
      %826 = vmatprep.subr.bf16.mxu0 0
      %827 = vmatpush1.bf16.msra.mxu0 0
      %828 = vmatprep.subr.bf16.mxu0 0
      %829 = vmatpush1.bf16.msra.mxu0 0
      %830 = vmatprep.subr.bf16.mxu0 0
      %831 = vmatpush1.bf16.msra.mxu0 0
      %832 = vmatprep.mubr.bf16.mxu0 0
      %833 = vmatmul.mubr.bf16.gmra.mrb[0].mxu0 %v798
      %v834 = vpop.f32.mrb[0].mxu0
      %v835 = vadd.f32 0.0, %v834
      %v836 = vpop.f32.mrb[0].mxu0
      %v837 = vpop.f32.mrb[0].mxu0
      %v838 = vadd.f32 0.0, %v837
      %v839 = vpop.f32.mrb[0].mxu0
      %840 = vdwg.mxu0
      %s841 = scalar_lea.vmem %s239, 32
      %v842 = vld [vmem:[%s841] sm:$0xff]
      %v843 = vld [vmem:[%s841 + $0x8] sm:$0xff]
      %844 = vrot.lane.b32.xlu0 %v468, 64
      %v845 = vpop.permute.xlu0 %844
      %846 = vrot.lane.b32.xlu0 %v472, 64
      %v847 = vpop.permute.xlu0 %846
      %848 = vrot.lane.b32.xlu0 %v470, 64
      %v849 = vpop.permute.xlu0 %848
      %850 = vrot.lane.b32.xlu0 %v474, 64
      %v851 = vpop.permute.xlu0 %850
      %v852 = vsel %vm519, %v845, 0
      %v854 = vsel %vm519, %v847, 0
      %v856 = vsel %vm519, %v849, 0
      %v858 = vsel %vm519, %v851, 0
      %860 = vmatprep.subr.mxu0 0.0
      %861 = vmatpush1.xpose.msra.mxu0 %v856
      %862 = vmatprep.subr.mxu0 0.0
      %863 = vmatpush1.xpose.msra.mxu0 %v858
      %864 = vmatprep.subr.mxu0 0.0
      %865 = vmatpush1.xpose.msra.mxu0 0.0
      %866 = vmatprep.subr.mxu0 0.0
      %867 = vmatpush1.xpose.msra.mxu0 0.0
      %868 = vmatprep.subr.mxu0 0.0
      %869 = vmatpush1.xpose.msra.mxu0 0.0
      %870 = vmatprep.subr.mxu0 0.0
      %871 = vmatpush1.xpose.msra.mxu0 0.0
      %872 = vmatprep.subr.mxu0 0.0
      %873 = vmatpush1.xpose.msra.mxu0 0.0
      %874 = vmatprep.subr.mxu0 0.0
      %875 = vmatpush1.xpose.msra.mxu0 0.0
      %876 = vmatprep.subr.mxu0 0.0
      %877 = vmatpush1.xpose.msra.mxu0 0.0
      %878 = vmatprep.subr.mxu0 0.0
      %879 = vmatpush1.xpose.msra.mxu0 0.0
      %880 = vmatprep.subr.mxu0 0.0
      %881 = vmatpush1.xpose.msra.mxu0 0.0
      %882 = vmatprep.subr.mxu0 0.0
      %883 = vmatpush1.xpose.msra.mxu0 0.0
      %884 = vmatprep.subr.mxu0 0.0
      %885 = vmatpush1.xpose.msra.mxu0 0.0
      %886 = vmatprep.subr.mxu0 0.0
      %887 = vmatpush1.xpose.msra.mxu0 0.0
      %888 = vmatprep.subr.mxu0 0.0
      %889 = vmatpush1.xpose.msra.mxu0 0.0
      %890 = vmatprep.subr.mxu0 0.0
      %891 = vmatpush1.xpose.msra.mxu0 0.0
      %892 = vmatprep.subr.mxu0 0.0
      %893 = vmatpush1.xpose.msra.mxu0 0.0
      %894 = vmatprep.subr.mxu0 0.0
      %895 = vmatpush1.xpose.msra.mxu0 0.0
      %896 = vmatprep.subr.mxu0 0.0
      %897 = vmatpush1.xpose.msra.mxu0 0.0
      %898 = vmatprep.subr.mxu0 0.0
      %899 = vmatpush1.xpose.msra.mxu0 0.0
      %900 = vmatprep.subr.mxu0 0.0
      %901 = vmatpush1.xpose.msra.mxu0 0.0
      %902 = vmatprep.subr.mxu0 0.0
      %903 = vmatpush1.xpose.msra.mxu0 0.0
      %904 = vmatprep.subr.mxu0 0.0
      %905 = vmatpush1.xpose.msra.mxu0 0.0
      %906 = vmatprep.subr.mxu0 0.0
      %907 = vmatpush1.xpose.msra.mxu0 0.0
      %908 = vmatprep.subr.mxu0 0.0
      %909 = vmatpush1.xpose.msra.mxu0 0.0
      %910 = vmatprep.subr.mxu0 0.0
      %911 = vmatpush1.xpose.msra.mxu0 0.0
      %912 = vmatprep.subr.mxu0 0.0
      %913 = vmatpush1.xpose.msra.mxu0 0.0
      %914 = vmatprep.subr.mxu0 0.0
      %915 = vmatpush1.xpose.msra.mxu0 0.0
      %916 = vmatprep.subr.mxu0 0.0
      %917 = vmatpush1.xpose.msra.mxu0 0.0
      %918 = vmatprep.subr.mxu0 0.0
      %919 = vmatpush1.xpose.msra.mxu0 0.0
      %920 = vmatprep.subr.mxu0 0.0
      %921 = vmatpush1.xpose.msra.mxu0 0.0
      %922 = vmatprep.subr.mxu0 0.0
      %923 = vmatpush1.xpose.msra.mxu0 0.0
      %924 = vmatprep.mubr.f32.mxu0 0.0
      %925 = vmatmul.mubr.f32.gmra.mrb[0].mxu0 %v852
      %v926 = vpop.f32.mrb[0].mxu0
      %v927 = vadd.f32 %v842, %v926
      %v928 = vpop.f32.mrb[0].mxu0
      %929 = vmatprep.mubr.f32.mxu0 0.0
      %930 = vmatmul.mubr.f32.gmra.mrb[0].mxu0 %v854
      %v931 = vpop.f32.mrb[0].mxu0
      %v932 = vadd.f32 %v843, %v931
      %v933 = vpop.f32.mrb[0].mxu0
      %934 = vdwg.mxu0
      %v935 = vsel %vm607, %v927, -inf
      %936 = vmax.xlane.f32.xlu0 %v935
      %v937 = vpop.xlane.xlu0 %936
      %v938 = vsel %vm607, %v932, -inf
      %939 = vmax.xlane.f32.xlu0 %v938
      %v940 = vpop.xlane.xlu0 %939
      %v941 = vsub.f32 %v927, %v937
      %v942 = vsub.f32 %v932, %v940
      %v943 = vmul.f32 %v941, 1.442695
      %v944 = vpow.pop %v943
      %v945 = vmul.f32 %v942, 1.442695
      %v946 = vpow.pop %v945
      %v947 = vsel %vm607, %v944, 0.0
      %948 = vadd.xlane.f32.xlu0 %v947
      %v949 = vpop.xlane.xlu0 %948
      %v950 = vsel %vm607, %v946, 0.0
      %951 = vadd.xlane.f32.xlu0 %v950
      %v952 = vpop.xlane.xlu0 %951
      %v953 = vrcp.pop %v949
      %v954 = vrcp.pop %v952
      %v955 = vmul.f32 %v944, %v953
      %v956 = vmul.f32 %v946, %v954
      %v957 = vpack.c.bf16 %v956, %v955
      %958 = vrot.lane.b32.xlu0 %v631, 64
      %v959 = vpop.permute.xlu0 %958
      %v962 = vsel %vm607, %v957, 0
      %964 = vmatprep.subr.bf16.mxu0 0
      %965 = vmatpush1.bf16.msra.mxu0 %v959
      %966 = vmatprep.subr.bf16.mxu0 0
      %967 = vmatpush1.bf16.msra.mxu0 0
      %968 = vmatprep.subr.bf16.mxu0 0
      %969 = vmatpush1.bf16.msra.mxu0 0
      %970 = vmatprep.subr.bf16.mxu0 0
      %971 = vmatpush1.bf16.msra.mxu0 0
      %972 = vmatprep.subr.bf16.mxu0 0
      %973 = vmatpush1.bf16.msra.mxu0 0
      %974 = vmatprep.subr.bf16.mxu0 0
      %975 = vmatpush1.bf16.msra.mxu0 0
      %976 = vmatprep.subr.bf16.mxu0 0
      %977 = vmatpush1.bf16.msra.mxu0 0
      %978 = vmatprep.subr.bf16.mxu0 0
      %979 = vmatpush1.bf16.msra.mxu0 0
      %980 = vmatprep.subr.bf16.mxu0 0
      %981 = vmatpush1.bf16.msra.mxu0 0
      %982 = vmatprep.subr.bf16.mxu0 0
      %983 = vmatpush1.bf16.msra.mxu0 0
      %984 = vmatprep.subr.bf16.mxu0 0
      %985 = vmatpush1.bf16.msra.mxu0 0
      %986 = vmatprep.subr.bf16.mxu0 0
      %987 = vmatpush1.bf16.msra.mxu0 0
      %988 = vmatprep.subr.bf16.mxu0 0
      %989 = vmatpush1.bf16.msra.mxu0 0
      %990 = vmatprep.subr.bf16.mxu0 0
      %991 = vmatpush1.bf16.msra.mxu0 0
      %992 = vmatprep.subr.bf16.mxu0 0
      %993 = vmatpush1.bf16.msra.mxu0 0
      %994 = vmatprep.subr.bf16.mxu0 0
      %995 = vmatpush1.bf16.msra.mxu0 0
      %996 = vmatprep.mubr.bf16.mxu0 0
      %997 = vmatmul.mubr.bf16.gmra.mrb[0].mxu0 %v962
      %v998 = vpop.f32.mrb[0].mxu0
      %v999 = vadd.f32 0.0, %v998
      %v1000 = vpop.f32.mrb[0].mxu0
      %v1001 = vpop.f32.mrb[0].mxu0
      %v1002 = vadd.f32 0.0, %v1001
      %v1003 = vpop.f32.mrb[0].mxu0
      %1004 = vdwg.mxu0
      %s1005 = scalar_lea.vmem %s239, 48
      %v1006 = vld [vmem:[%s1005] sm:$0xff]
      %v1007 = vld [vmem:[%s1005 + $0x8] sm:$0xff]
      %1008 = vrot.lane.b32.xlu0 %v468, 32
      %v1009 = vpop.permute.xlu0 %1008
      %1010 = vrot.lane.b32.xlu0 %v472, 32
      %v1011 = vpop.permute.xlu0 %1010
      %1012 = vrot.lane.b32.xlu0 %v470, 32
      %v1013 = vpop.permute.xlu0 %1012
      %1014 = vrot.lane.b32.xlu0 %v474, 32
      %v1015 = vpop.permute.xlu0 %1014
      %v1016 = vsel %vm519, %v1009, 0
      %v1018 = vsel %vm519, %v1011, 0
      %v1020 = vsel %vm519, %v1013, 0
      %v1022 = vsel %vm519, %v1015, 0
      %1024 = vmatprep.subr.mxu0 0.0
      %1025 = vmatpush1.xpose.msra.mxu0 %v1020
      %1026 = vmatprep.subr.mxu0 0.0
      %1027 = vmatpush1.xpose.msra.mxu0 %v1022
      %1028 = vmatprep.subr.mxu0 0.0
      %1029 = vmatpush1.xpose.msra.mxu0 0.0
      %1030 = vmatprep.subr.mxu0 0.0
      %1031 = vmatpush1.xpose.msra.mxu0 0.0
      %1032 = vmatprep.subr.mxu0 0.0
      %1033 = vmatpush1.xpose.msra.mxu0 0.0
      %1034 = vmatprep.subr.mxu0 0.0
      %1035 = vmatpush1.xpose.msra.mxu0 0.0
      %1036 = vmatprep.subr.mxu0 0.0
      %1037 = vmatpush1.xpose.msra.mxu0 0.0
      %1038 = vmatprep.subr.mxu0 0.0
      %1039 = vmatpush1.xpose.msra.mxu0 0.0
      %1040 = vmatprep.subr.mxu0 0.0
      %1041 = vmatpush1.xpose.msra.mxu0 0.0
      %1042 = vmatprep.subr.mxu0 0.0
      %1043 = vmatpush1.xpose.msra.mxu0 0.0
      %1044 = vmatprep.subr.mxu0 0.0
      %1045 = vmatpush1.xpose.msra.mxu0 0.0
      %1046 = vmatprep.subr.mxu0 0.0
      %1047 = vmatpush1.xpose.msra.mxu0 0.0
      %1048 = vmatprep.subr.mxu0 0.0
      %1049 = vmatpush1.xpose.msra.mxu0 0.0
      %1050 = vmatprep.subr.mxu0 0.0
      %1051 = vmatpush1.xpose.msra.mxu0 0.0
      %1052 = vmatprep.subr.mxu0 0.0
      %1053 = vmatpush1.xpose.msra.mxu0 0.0
      %1054 = vmatprep.subr.mxu0 0.0
      %1055 = vmatpush1.xpose.msra.mxu0 0.0
      %1056 = vmatprep.subr.mxu0 0.0
      %1057 = vmatpush1.xpose.msra.mxu0 0.0
      %1058 = vmatprep.subr.mxu0 0.0
      %1059 = vmatpush1.xpose.msra.mxu0 0.0
      %1060 = vmatprep.subr.mxu0 0.0
      %1061 = vmatpush1.xpose.msra.mxu0 0.0
      %1062 = vmatprep.subr.mxu0 0.0
      %1063 = vmatpush1.xpose.msra.mxu0 0.0
      %1064 = vmatprep.subr.mxu0 0.0
      %1065 = vmatpush1.xpose.msra.mxu0 0.0
      %1066 = vmatprep.subr.mxu0 0.0
      %1067 = vmatpush1.xpose.msra.mxu0 0.0
      %1068 = vmatprep.subr.mxu0 0.0
      %1069 = vmatpush1.xpose.msra.mxu0 0.0
      %1070 = vmatprep.subr.mxu0 0.0
      %1071 = vmatpush1.xpose.msra.mxu0 0.0
      %1072 = vmatprep.subr.mxu0 0.0
      %1073 = vmatpush1.xpose.msra.mxu0 0.0
      %1074 = vmatprep.subr.mxu0 0.0
      %1075 = vmatpush1.xpose.msra.mxu0 0.0
      %1076 = vmatprep.subr.mxu0 0.0
      %1077 = vmatpush1.xpose.msra.mxu0 0.0
      %1078 = vmatprep.subr.mxu0 0.0
      %1079 = vmatpush1.xpose.msra.mxu0 0.0
      %1080 = vmatprep.subr.mxu0 0.0
      %1081 = vmatpush1.xpose.msra.mxu0 0.0
      %1082 = vmatprep.subr.mxu0 0.0
      %1083 = vmatpush1.xpose.msra.mxu0 0.0
      %1084 = vmatprep.subr.mxu0 0.0
      %1085 = vmatpush1.xpose.msra.mxu0 0.0
      %1086 = vmatprep.subr.mxu0 0.0
      %1087 = vmatpush1.xpose.msra.mxu0 0.0
      %1088 = vmatprep.mubr.f32.mxu0 0.0
      %1089 = vmatmul.mubr.f32.gmra.mrb[0].mxu0 %v1016
      %v1090 = vpop.f32.mrb[0].mxu0
      %v1091 = vadd.f32 %v1006, %v1090
      %v1092 = vpop.f32.mrb[0].mxu0
      %1093 = vmatprep.mubr.f32.mxu0 0.0
      %1094 = vmatmul.mubr.f32.gmra.mrb[0].mxu0 %v1018
      %v1095 = vpop.f32.mrb[0].mxu0
      %v1096 = vadd.f32 %v1007, %v1095
      %v1097 = vpop.f32.mrb[0].mxu0
      %1098 = vdwg.mxu0
      %v1099 = vsel %vm607, %v1091, -inf
      %1100 = vmax.xlane.f32.xlu0 %v1099
      %v1101 = vpop.xlane.xlu0 %1100
      %v1102 = vsel %vm607, %v1096, -inf
      %1103 = vmax.xlane.f32.xlu0 %v1102
      %v1104 = vpop.xlane.xlu0 %1103
      %v1105 = vsub.f32 %v1091, %v1101
      %v1106 = vsub.f32 %v1096, %v1104
      %v1107 = vmul.f32 %v1105, 1.442695
      %v1108 = vpow.pop %v1107
      %v1109 = vmul.f32 %v1106, 1.442695
      %v1110 = vpow.pop %v1109
      %v1111 = vsel %vm607, %v1108, 0.0
      %1112 = vadd.xlane.f32.xlu0 %v1111
      %v1113 = vpop.xlane.xlu0 %1112
      %v1114 = vsel %vm607, %v1110, 0.0
      %1115 = vadd.xlane.f32.xlu0 %v1114
      %v1116 = vpop.xlane.xlu0 %1115
      %v1117 = vrcp.pop %v1113
      %v1118 = vrcp.pop %v1116
      %v1119 = vmul.f32 %v1108, %v1117
      %v1120 = vmul.f32 %v1110, %v1118
      %v1121 = vpack.c.bf16 %v1120, %v1119
      %1122 = vrot.lane.b32.xlu0 %v631, 32
      %v1123 = vpop.permute.xlu0 %1122
      %v1126 = vsel %vm607, %v1121, 0
      %1128 = vmatprep.subr.bf16.mxu0 0
      %1129 = vmatpush1.bf16.msra.mxu0 %v1123
      %1130 = vmatprep.subr.bf16.mxu0 0
      %1131 = vmatpush1.bf16.msra.mxu0 0
      %1132 = vmatprep.subr.bf16.mxu0 0
      %1133 = vmatpush1.bf16.msra.mxu0 0
      %1134 = vmatprep.subr.bf16.mxu0 0
      %1135 = vmatpush1.bf16.msra.mxu0 0
      %1136 = vmatprep.subr.bf16.mxu0 0
      %1137 = vmatpush1.bf16.msra.mxu0 0
      %1138 = vmatprep.subr.bf16.mxu0 0
      %1139 = vmatpush1.bf16.msra.mxu0 0
      %1140 = vmatprep.subr.bf16.mxu0 0
      %1141 = vmatpush1.bf16.msra.mxu0 0
      %1142 = vmatprep.subr.bf16.mxu0 0
      %1143 = vmatpush1.bf16.msra.mxu0 0
      %1144 = vmatprep.subr.bf16.mxu0 0
      %1145 = vmatpush1.bf16.msra.mxu0 0
      %1146 = vmatprep.subr.bf16.mxu0 0
      %1147 = vmatpush1.bf16.msra.mxu0 0
      %1148 = vmatprep.subr.bf16.mxu0 0
      %1149 = vmatpush1.bf16.msra.mxu0 0
      %1150 = vmatprep.subr.bf16.mxu0 0
      %1151 = vmatpush1.bf16.msra.mxu0 0
      %1152 = vmatprep.subr.bf16.mxu0 0
      %1153 = vmatpush1.bf16.msra.mxu0 0
      %1154 = vmatprep.subr.bf16.mxu0 0
      %1155 = vmatpush1.bf16.msra.mxu0 0
      %1156 = vmatprep.subr.bf16.mxu0 0
      %1157 = vmatpush1.bf16.msra.mxu0 0
      %1158 = vmatprep.subr.bf16.mxu0 0
      %1159 = vmatpush1.bf16.msra.mxu0 0
      %1160 = vmatprep.mubr.bf16.mxu0 0
      %1161 = vmatmul.mubr.bf16.gmra.mrb[0].mxu0 %v1126
      %v1162 = vpop.f32.mrb[0].mxu0
      %v1163 = vadd.f32 0.0, %v1162
      %v1164 = vpop.f32.mrb[0].mxu0
      %v1165 = vpop.f32.mrb[0].mxu0
      %v1166 = vadd.f32 0.0, %v1165
      %v1167 = vpop.f32.mrb[0].mxu0
      %1168 = vdwg.mxu0
      %1171 = vrot.lane.b32.xlu0 %v835, 32
      %v1172 = vpop.permute.xlu0 %1171
      %1173 = vrot.lane.b32.xlu0 %v838, 32
      %v1174 = vpop.permute.xlu0 %1173
      %1179 = vrot.lane.b32.xlu0 %v999, 64
      %v1180 = vpop.permute.xlu0 %1179
      %1181 = vrot.lane.b32.xlu0 %v1002, 64
      %v1182 = vpop.permute.xlu0 %1181
      %1187 = vrot.lane.b32.xlu0 %v1163, 96
      %v1188 = vpop.permute.xlu0 %1187
      %1189 = vrot.lane.b32.xlu0 %v1166, 96
      %v1190 = vpop.permute.xlu0 %1189
      %v1193 = vsel %vm519, %v670, %v1172
      %v1194 = vsel %vm519, %v673, %v1174
      %vm1195 = vcmask 523264
      %v1196 = vsel %vm1195, %v1193, %v1180
      %v1197 = vsel %vm1195, %v1194, %v1182
      %vm1198 = vcmask 785408
      %v1199 = vsel %vm1198, %v1196, %v1188
      %v1200 = vsel %vm1198, %v1197, %v1190
      %v1201 = vpack.c.bf16 %v1200, %v1199
      %v1202 = vld [vmem:[%s3] sm:$0xf]
      %v1203 = vld [vmem:[%s3 + $0x4] sm:$0xf]
      %v1204 = vld [vmem:[%s3 + $0x8] sm:$0xf]
      %v1205 = vld [vmem:[%s3 + $0xc] sm:$0xf]
      %v1206 = vld [vmem:[%s3 + $0x10] sm:$0xf]
      %v1207 = vld [vmem:[%s3 + $0x14] sm:$0xf]
      %v1208 = vld [vmem:[%s3 + $0x18] sm:$0xf]
      %v1209 = vld [vmem:[%s3 + $0x1c] sm:$0xf]
      %v1210 = vld [vmem:[%s3 + $0x20] sm:$0xf]
      %v1211 = vld [vmem:[%s3 + $0x24] sm:$0xf]
      %v1212 = vld [vmem:[%s3 + $0x28] sm:$0xf]
      %v1213 = vld [vmem:[%s3 + $0x2c] sm:$0xf]
      %v1214 = vld [vmem:[%s3 + $0x30] sm:$0xf]
      %v1215 = vld [vmem:[%s3 + $0x34] sm:$0xf]
      %v1216 = vld [vmem:[%s3 + $0x38] sm:$0xf]
      %v1217 = vld [vmem:[%s3 + $0x3c] sm:$0xf]
      %v1234 = vunpack.c.l.b16 %v1202
      %v1235 = vunpack.c.l.b16 %v1203
      %v1236 = vunpack.c.l.b16 %v1204
      %v1237 = vunpack.c.l.b16 %v1205
      %v1238 = vunpack.c.l.b16 %v1206
      %v1239 = vunpack.c.l.b16 %v1207
      %v1240 = vunpack.c.l.b16 %v1208
      %v1241 = vunpack.c.l.b16 %v1209
      %v1242 = vunpack.c.l.b16 %v1210
      %v1243 = vunpack.c.l.b16 %v1211
      %v1244 = vunpack.c.l.b16 %v1212
      %v1245 = vunpack.c.l.b16 %v1213
      %v1246 = vunpack.c.l.b16 %v1214
      %v1247 = vunpack.c.l.b16 %v1215
      %v1248 = vunpack.c.l.b16 %v1216
      %v1249 = vunpack.c.l.b16 %v1217
      %v1250 = vpack.c.b16 %v1235, %v1234
      %v1251 = vpack.c.b16 %v1237, %v1236
      %v1252 = vpack.c.b16 %v1239, %v1238
      %v1253 = vpack.c.b16 %v1241, %v1240
      %v1254 = vpack.c.b16 %v1243, %v1242
      %v1255 = vpack.c.b16 %v1245, %v1244
      %v1256 = vpack.c.b16 %v1247, %v1246
      %v1257 = vpack.c.b16 %v1249, %v1248
      %1266 = vmatprep.subr.bf16.mxu0 0
      %1267 = vmatpush1.bf16.msra.mxu0 %v1250
      %1268 = vmatprep.subr.bf16.mxu0 0
      %1269 = vmatpush1.bf16.msra.mxu0 %v1251
      %1270 = vmatprep.subr.bf16.mxu0 0
      %1271 = vmatpush1.bf16.msra.mxu0 %v1252
      %1272 = vmatprep.subr.bf16.mxu0 0
      %1273 = vmatpush1.bf16.msra.mxu0 %v1253
      %1274 = vmatprep.subr.bf16.mxu0 0
      %1275 = vmatpush1.bf16.msra.mxu0 %v1254
      %1276 = vmatprep.subr.bf16.mxu0 0
      %1277 = vmatpush1.bf16.msra.mxu0 %v1255
      %1278 = vmatprep.subr.bf16.mxu0 0
      %1279 = vmatpush1.bf16.msra.mxu0 %v1256
      %1280 = vmatprep.subr.bf16.mxu0 0
      %1281 = vmatpush1.bf16.msra.mxu0 %v1257
      %1282 = vmatprep.subr.bf16.mxu0 0
      %1283 = vmatpush1.bf16.msra.mxu0 0
      %1284 = vmatprep.subr.bf16.mxu0 0
      %1285 = vmatpush1.bf16.msra.mxu0 0
      %1286 = vmatprep.subr.bf16.mxu0 0
      %1287 = vmatpush1.bf16.msra.mxu0 0
      %1288 = vmatprep.subr.bf16.mxu0 0
      %1289 = vmatpush1.bf16.msra.mxu0 0
      %1290 = vmatprep.subr.bf16.mxu0 0
      %1291 = vmatpush1.bf16.msra.mxu0 0
      %1292 = vmatprep.subr.bf16.mxu0 0
      %1293 = vmatpush1.bf16.msra.mxu0 0
      %1294 = vmatprep.subr.bf16.mxu0 0
      %1295 = vmatpush1.bf16.msra.mxu0 0
      %1296 = vmatprep.subr.bf16.mxu0 0
      %1297 = vmatpush1.bf16.msra.mxu0 0
      %1298 = vmatprep.mubr.bf16.mxu0 0
      %1299 = vmatmul.mubr.bf16.gmra.mrb[0].mxu0 %v1201
      %v1300 = vpop.f32.mrb[0].mxu0
      %v1301 = vadd.f32 0.0, %v1300
      %v1302 = vpop.f32.mrb[0].mxu0
      %v1303 = vpop.f32.mrb[0].mxu0
      %v1304 = vadd.f32 0.0, %v1303
      %v1305 = vpop.f32.mrb[0].mxu0
      %1306 = vdwg.mxu0
      %v1307 = vadd.f32 %v246, %v1301
      %v1308 = vadd.f32 %v247, %v1304
      %1309 = vst [vmem:[%s244] sm:$0xff] %v1307
      %1310 = vst [vmem:[%s244 + $0x8] sm:$0xff] %v1308
      %p1311 = scmp.lt.s32.totalorder %s16, 1
      %s1312 = scalar_select %p1311, %s16, 1
      %s1313 = smul.addr %s1312, 2
      %s1314 = smul.addr %s1313, 8
      %s1315 = scalar_lea.vmem %s5, %s1314
      // Predicated region
      $region41: #{prompt_encoder_forward.5} parent=39 // pred_check
        %p1316 = pneg %p149
      $region42: #{prompt_encoder_forward.5} parent=39 // pred_check_branch
        %1318 = sbr.rel (%p1316) target = $region44
      $region43: #{prompt_encoder_forward.5} parent=39 // pred_region
        _
      $region44: #{prompt_encoder_forward.5} parent=39 // pred_fallthru
        _
    $region40: #{prompt_encoder_forward.5} parent=5 // pred_fallthru
      _
    %p1319 = scmp.le.s32.totalorder 2, %s11
    // Predicated region
    $region45: #{prompt_encoder_forward.5} parent=5 // pred_check
      %p1320 = pneg %p1319
    $region46: #{prompt_encoder_forward.5} parent=5 // pred_check_branch
      %1322 = sbr.rel (%p1320) target = $region48
    $region47: #{prompt_encoder_forward.5} parent=5 // pred_region
      %s1323 = ssub.s32 %s11, 2
      // Predicated region
      $region49: #{prompt_encoder_forward.5} parent=47 // pred_check
        %p1324 = pneg %p155
      $region50: #{prompt_encoder_forward.5} parent=47 // pred_check_branch
        %1326 = sbr.rel (%p1324) target = $region52
      $region51: #{prompt_encoder_forward.5} parent=47 // pred_region
        %p1327 = scmp.lt.s32.totalorder %s17, 1
        %s1328 = scalar_select %p1327, %s17, 1
        %s1329 = smul.addr %s1328, 2
        %s1330 = smul.addr %s1329, 8
        %s1331 = scalar_lea.vmem %s5, %s1330
      $region52: #{prompt_encoder_forward.5} parent=47 // pred_fallthru
        _
    $region48: #{prompt_encoder_forward.5} parent=5 // pred_fallthru
      _
  $region6: #{prompt_encoder_forward.5} parent=0 // loop_footer
    %s15 = sadd.s32 1, %s11
  $region7: #{prompt_encoder_forward.5} parent=0 // loop_footer_branch
    %10 = sbr.rel target = $region3
  $region8: #{prompt_encoder_forward.5} parent=0 // loop_exit
    _

</llo_original>
